<compile_context>
chip_gen: v5e
topology: v5e:2x2
jax: 0.10.0
libtpu: 0.0.40
codegen_flags: <defaults>
</compile_context>

<pallas_src>
import functools

import jax
import jax.numpy as jnp
from jax.experimental import pallas as pl
from jax.experimental.pallas import tpu as pltpu


# ----------------------------- Pallas kernels ------------------------------

def _speech_encoder_kernel(p1_ref, p2_ref, p3_ref,
                           w1_ref, b1_ref, w2_ref, b2_ref, w3_ref, b3_ref,
                           g1_ref, g2_ref, g3_ref,
                           be1_ref, be2_ref, be3_ref,
                           cw1_ref, cw2_ref, cw3_ref, cb_ref,
                           o_ref):
    """Fused SpeechEncoder + ChanneledLayerNorm + pointwise conv1.

    Three Conv1d(1->F, strided)+ReLU branches, LayerNorm over the 3F channels
    (computed from per-branch partial sums, no concat), then the 3F->C
    pointwise conv as a sum of three per-branch MXU matmuls. Emits a
    lane-dense (TR, C) bf16 row tile."""
    eps = 1e-5
    F = b1_ref.shape[-1]

    def branch(p_ref, w_ref, b_ref):
        y = jnp.dot(p_ref[...], w_ref[...], preferred_element_type=jnp.float32)
        return jnp.maximum(y + b_ref[...], 0.0)

    y1 = branch(p1_ref, w1_ref, b1_ref)
    y2 = branch(p2_ref, w2_ref, b2_ref)
    y3 = branch(p3_ref, w3_ref, b3_ref)

    # LayerNorm over the 3F channels: combine per-branch row sums / sumsq.
    inv_n = 1.0 / (3.0 * F)
    s = (jnp.sum(y1, -1, keepdims=True) + jnp.sum(y2, -1, keepdims=True)
         + jnp.sum(y3, -1, keepdims=True))
    ss = (jnp.sum(y1 * y1, -1, keepdims=True)
          + jnp.sum(y2 * y2, -1, keepdims=True)
          + jnp.sum(y3 * y3, -1, keepdims=True))
    mu = s * inv_n
    var = ss * inv_n - mu * mu
    inv_std = jax.lax.rsqrt(var + eps)

    def norm_bf16(y, g_ref, b_ref):
        return ((y - mu) * inv_std * g_ref[...] + b_ref[...]).astype(jnp.bfloat16)

    # Fused pointwise conv1 (3F -> C): sum of three per-branch matmuls.
    h = (jnp.dot(norm_bf16(y1, g1_ref, be1_ref), cw1_ref[...],
                 preferred_element_type=jnp.float32)
         + jnp.dot(norm_bf16(y2, g2_ref, be2_ref), cw2_ref[...],
                   preferred_element_type=jnp.float32)
         + jnp.dot(norm_bf16(y3, g3_ref, be3_ref), cw3_ref[...],
                   preferred_element_type=jnp.float32)
         + cb_ref[...])
    o_ref[...] = h.astype(o_ref.dtype)


def _speaker_kernel(x_ref,
                    rwA_ref, rbA_ref, rgA_ref, rtA_ref, rpA_ref,
                    rwB_ref, rbB_ref, rgB_ref, rtB_ref, rpB_ref,
                    w2_ref, b2_ref, wh_ref, bh_ref,
                    logits_ref, *, B, L0, R_n):
    """SpeakerEncoder ResNet stack + conv2 + time-mean + Linear head.

    Input x is the already-normalized, conv1'd (B*L0, C) bf16 slab coming
    straight from the speech-encoder kernel."""
    eps = 1e-5
    C = rbA_ref.shape[-1]

    def mm(a_bf16, w):  # bf16 operands on the MXU, f32 accumulation
        return jnp.dot(a_bf16, w, preferred_element_type=jnp.float32)

    def bn(y, gamma, beta, nrows):
        # Train-mode BatchNorm1d stats over (batch, time) rows, computed in a
        # single pass (sum / sum-of-squares) and folded into one scale/shift
        # FMA per element.
        s = jnp.sum(y, axis=0, keepdims=True)
        ss = jnp.sum(y * y, axis=0, keepdims=True)
        m = s * (1.0 / nrows)
        v = ss * (1.0 / nrows) - m * m
        scale = gamma * jax.lax.rsqrt(v + eps)
        shift = beta - m * scale
        return y * scale + shift

    def prelu(y, a):
        return jnp.where(y > 0, y, a * y)

    h = x_ref[...]                                        # (B*L0, C) bf16
    L = L0
    for r in range(R_n):                                  # ResNetBlock stack
        nrows = float(B * L)
        y = mm(h, rwA_ref[r]) + rbA_ref[r:r + 1]          # f32
        y = prelu(bn(y, rgA_ref[r:r + 1], rtA_ref[r:r + 1], nrows),
                  rpA_ref[r:r + 1])
        y = mm(y.astype(jnp.bfloat16), rwB_ref[r]) + rbB_ref[r:r + 1]
        y = bn(y, rgB_ref[r:r + 1], rtB_ref[r:r + 1], nrows)
        z = prelu(h.astype(jnp.float32) + y, rpB_ref[r:r + 1])
        # MaxPool1d(kernel=3, stride=3). L % 3 == 0 asserted in the wrapper so
        # pooling groups never cross a batch boundary.
        # TODO(synk): benchmark the strided-view variant (max of z[0::3],
        # z[1::3], z[2::3]) against this reshape-based reduction.
        L = L // 3
        h = jnp.max(z.reshape(B * L, 3, C), axis=1).astype(jnp.bfloat16)

    # pointwise conv2, then per-example mean over time, then Linear head.
    h2 = mm(h, w2_ref[...]) + b2_ref[...]                 # (B*L, C) f32
    emb = jnp.mean(h2.reshape(B, L, C), axis=1)           # (B, C)
    logits_ref[...] = mm(emb.astype(jnp.bfloat16), wh_ref[...]) + bh_ref[...]


# ------------------------------- wrappers -----------------------------------

def _vmem_spec():
    return pl.BlockSpec(memory_space=pltpu.MemorySpace.VMEM)


def _speaker_vmem_limit_bytes():
    # Generation-aware cap: ~75% of physical VMEM (v7x: ~48 MiB, v5e/v6e:
    # ~96 MiB). Conservative fallback fits every generation.
    try:
        cap = pltpu.get_tpu_info().vmem_capacity_bytes
        return int(cap * 3 // 4)
    except Exception:
        return 48 << 20


def speech_encoder(ref_wave, sp_enc, sp_spk):
    """Fused three-branch strided Conv1d(1->F)+ReLU + LN + conv1 -> (B*L, C) bf16."""
    B, T = ref_wave.shape
    stride = sp_enc['l1'] // 2
    patches, weights, lengths = [], [], []
    for name, k in (('conv1', sp_enc['l1']), ('conv2', sp_enc['l2']),
                    ('conv3', sp_enc['l3'])):
        pad = k // 2
        L = (T + 2 * pad - k) // stride + 1
        # im2col with one XLA op; patches cast to bf16 in the wrapper (halves
        # HBM->VMEM bytes for the encoder's largest inputs).
        # TODO(synk): at realistic SpEx+ kernel sizes (20/80/160) feed the raw
        # waveform through a windowed BlockSpec / manual DMA instead of
        # materializing the im2col blow-up in HBM.
        p = jax.lax.conv_general_dilated_patches(
            ref_wave[:, None, :], filter_shape=(k,),
            window_strides=(stride,), padding=[(pad, pad)])      # (B, k, L)
        patches.append(jnp.transpose(p, (0, 2, 1))
                       .reshape(B * L, k).astype(jnp.bfloat16))
        weights.append(sp_enc[name])         # (w:(k,F) bf16, b:(1,F) f32)
        lengths.append(L)
    assert lengths[0] == lengths[1] == lengths[2], "branch lengths must match"
    L = lengths[0]
    R = B * L
    F = weights[0][0].shape[1]
    C = sp_spk['w1'].shape[1]

    # Split the fused LN / conv1 parameters per encoder branch on the host
    # side (tiny, XLA-side slices) so the kernel never builds a (TR, 3F)
    # concatenation before the LN / conv1 matmuls.
    g = [sp_spk['ln_g'][:, i * F:(i + 1) * F] for i in range(3)]
    be = [sp_spk['ln_b'][:, i * F:(i + 1) * F] for i in range(3)]
    cw = [sp_spk['w1'][i * F:(i + 1) * F, :] for i in range(3)]
    cb = sp_spk['b1']

    # Row tiling: large tiles amortize per-step overhead; "parallel" lets a
    # v7x chip split the row grid over its two TensorCores (no-op otherwise).
    TR = R if R <= 1024 else 1024
    grid = (pl.cdiv(R, TR),)

    def row_spec(width):
        return pl.BlockSpec((TR, width), lambda i: (i, 0))

    def const_spec(a):
        return pl.BlockSpec(a.shape, lambda i: (0, 0))

    consts = [weights[0][0], weights[0][1], weights[1][0], weights[1][1],
              weights[2][0], weights[2][1],
              g[0], g[1], g[2], be[0], be[1], be[2],
              cw[0], cw[1], cw[2], cb]

    out = pl.pallas_call(
        _speech_encoder_kernel,
        out_shape=jax.ShapeDtypeStruct((R, C), jnp.bfloat16),
        grid=grid,
        in_specs=[row_spec(p.shape[1]) for p in patches]
                 + [const_spec(a) for a in consts],
        out_specs=pl.BlockSpec((TR, C), lambda i: (i, 0)),
        compiler_params=pltpu.CompilerParams(
            dimension_semantics=("parallel",)),
    )(patches[0], patches[1], patches[2], *consts)
    return out, B, L                                       # (B*L, C) bf16


def speaker_encoder(x2d, B, L0, sp):
    R_n = sp['rwA'].shape[0]
    n_classes = sp['wh'].shape[1]
    L = L0
    for _ in range(R_n):
        # TODO(synk): PyTorch MaxPool1d silently drops a len%3 tail; the
        # flattened-slab pooling here requires exact divisibility instead.
        assert L % 3 == 0, "maxpool requires time length divisible by 3"
        L //= 3
    kern = functools.partial(_speaker_kernel, B=B, L0=L0, R_n=R_n)
    # TODO(synk): train-mode BN stats and the per-example time mean are global
    # reductions, so this stage stays gridless (whole slab VMEM resident) for
    # demo sizes; at realistic SpEx+ sizes row-tile it with a two-pass BN (or
    # eval-mode running stats) -- gridless also uses only one v7x TensorCore.
    logits = pl.pallas_call(
        kern,
        out_shape=jax.ShapeDtypeStruct((B, n_classes), jnp.float32),
        in_specs=[_vmem_spec()] * 15,
        out_specs=_vmem_spec(),
        compiler_params=pltpu.CompilerParams(
            vmem_limit_bytes=_speaker_vmem_limit_bytes()),
    )(x2d,
      sp['rwA'], sp['rbA'], sp['rgA'], sp['rtA'], sp['rpA'],
      sp['rwB'], sp['rbB'], sp['rgB'], sp['rtB'], sp['rpB'],
      sp['w2'], sp['b2'],
      sp['wh'], sp['bh'])
    return logits


def simple_model_forward(mixed_wave, ref_wave, params):
    x2d, B, L = speech_encoder(ref_wave, params['speech'], params['speaker'])
    preds = speaker_encoder(x2d, B, L, params['speaker'])
    return {'separated': mixed_wave, 'predicted_speakers': preds}


# --------------------------- deterministic params ---------------------------

def init_params(key, *, n_classes, l1, l2, l3, n_filters, R_n, C):
    def p(i, shape, scale=0.2, dtype=jnp.float32):
        v = scale * jax.random.normal(jax.random.fold_in(key, i), shape,
                                      jnp.float32)
        return v.astype(dtype)

    bf = jnp.bfloat16
    C_in = 3 * n_filters
    speech = {
        'l1': l1, 'l2': l2, 'l3': l3,
        # conv weights pre-transposed to (k, F) and stored bf16 (MXU operands);
        # biases stay f32 for the VPU epilogue.
        'conv1': (p(0, (l1, n_filters), dtype=bf), p(1, (1, n_filters))),
        'conv2': (p(2, (l2, n_filters), dtype=bf), p(3, (1, n_filters))),
        'conv3': (p(4, (l3, n_filters), dtype=bf), p(5, (1, n_filters))),
    }
    # pointwise-conv / linear weights stored pre-transposed (in, out), bf16.
    speaker = {
        'ln_g': 1.0 + p(10, (1, C_in), 0.05), 'ln_b': p(11, (1, C_in), 0.05),
        'w1': p(12, (C_in, C), dtype=bf), 'b1': p(13, (1, C)),
        'rwA': p(20, (R_n, C, C), dtype=bf), 'rbA': p(21, (R_n, C)),
        'rgA': 1.0 + p(22, (R_n, C), 0.05), 'rtA': p(23, (R_n, C), 0.05),
        'rpA': 0.25 + p(24, (R_n, 1), 0.01),
        'rwB': p(30, (R_n, C, C), dtype=bf), 'rbB': p(31, (R_n, C)),
        'rgB': 1.0 + p(32, (R_n, C), 0.05), 'rtB': p(33, (R_n, C), 0.05),
        'rpB': 0.25 + p(34, (R_n, 1), 0.01),
        'w2': p(40, (C, C), dtype=bf), 'b2': p(41, (1, C)),
        'wh': p(42, (C, n_classes), dtype=bf), 'bh': p(43, (1, n_classes)),
    }
    return {'speech': speech, 'speaker': speaker}


# ----------------------------------- main ------------------------------------

if __name__ == "__main__":
    B, T = 2, 16
    n_classes, l1, l2, l3, n_filters, R_n = 5, 4, 8, 16, 4, 2
    # Hidden width of SpeakerEncoder (free parameter -- the original module's
    # SpeakerEncoder call is missing one positional argument). 128 keeps the
    # pointwise convs lane-dense; on v6e/v7x (256x256 MXU) 256 would feed the
    # full systolic depth.
    C = 128

    params = init_params(jax.random.PRNGKey(0), n_classes=n_classes,
                         l1=l1, l2=l2, l3=l3, n_filters=n_filters,
                         R_n=R_n, C=C)

    k1, k2 = jax.random.split(jax.random.PRNGKey(0))
    mixed_wave = jax.random.normal(k1, (B, T), jnp.float32)
    ref_wave = jax.random.normal(k2, (B, T), jnp.float32)

    fwd = jax.jit(lambda m, r: simple_model_forward(m, r, params))
    out = fwd(mixed_wave, ref_wave)
    jax.block_until_ready(out)

    assert out['separated'].shape == (B, T)
    assert out['predicted_speakers'].shape == (B, n_classes)
    assert bool(jnp.all(jnp.isfinite(out['predicted_speakers'])))
    print("KERNEL_OK")
</pallas_src>

<mosaic_0001>
module attributes {stable_mosaic.version = 11 : i64} {
  func.func @_speech_encoder_kernel(%arg0: i32, %arg1: memref<18x4xbf16, #tpu.memory_space<vmem>>, %arg2: memref<18x8xbf16, #tpu.memory_space<vmem>>, %arg3: memref<18x16xbf16, #tpu.memory_space<vmem>>, %arg4: memref<4x4xbf16, #tpu.memory_space<vmem>>, %arg5: memref<1x4xf32, #tpu.memory_space<vmem>>, %arg6: memref<8x4xbf16, #tpu.memory_space<vmem>>, %arg7: memref<1x4xf32, #tpu.memory_space<vmem>>, %arg8: memref<16x4xbf16, #tpu.memory_space<vmem>>, %arg9: memref<1x4xf32, #tpu.memory_space<vmem>>, %arg10: memref<1x4xf32, #tpu.memory_space<vmem>>, %arg11: memref<1x4xf32, #tpu.memory_space<vmem>>, %arg12: memref<1x4xf32, #tpu.memory_space<vmem>>, %arg13: memref<1x4xf32, #tpu.memory_space<vmem>>, %arg14: memref<1x4xf32, #tpu.memory_space<vmem>>, %arg15: memref<1x4xf32, #tpu.memory_space<vmem>>, %arg16: memref<4x128xbf16, #tpu.memory_space<vmem>>, %arg17: memref<4x128xbf16, #tpu.memory_space<vmem>>, %arg18: memref<4x128xbf16, #tpu.memory_space<vmem>>, %arg19: memref<1x128xf32, #tpu.memory_space<vmem>>, %arg20: memref<18x128xbf16, #tpu.memory_space<vmem>>) attributes {dimension_semantics = [#tpu.dimension_semantics<parallel>], iteration_bounds = array<i64: 1>, scalar_prefetch = 0 : i64, scratch_operands = 0 : i64, tpu.core_type = #tpu.core_type<tc>, window_params = [{transform_indices = @transform_0, window_bounds = array<i64: 18, 4>}, {transform_indices = @transform_1, window_bounds = array<i64: 18, 8>}, {transform_indices = @transform_2, window_bounds = array<i64: 18, 16>}, {pipeline_mode = #tpu.pipeline_mode<synchronous>, transform_indices = @transform_3, window_bounds = array<i64: 4, 4>}, {pipeline_mode = #tpu.pipeline_mode<synchronous>, transform_indices = @transform_4, window_bounds = array<i64: 1, 4>}, {pipeline_mode = #tpu.pipeline_mode<synchronous>, transform_indices = @transform_5, window_bounds = array<i64: 8, 4>}, {pipeline_mode = #tpu.pipeline_mode<synchronous>, transform_indices = @transform_6, window_bounds = array<i64: 1, 4>}, {pipeline_mode = #tpu.pipeline_mode<synchronous>, transform_indices = @transform_7, window_bounds = array<i64: 16, 4>}, {pipeline_mode = #tpu.pipeline_mode<synchronous>, transform_indices = @transform_8, window_bounds = array<i64: 1, 4>}, {pipeline_mode = #tpu.pipeline_mode<synchronous>, transform_indices = @transform_9, window_bounds = array<i64: 1, 4>}, {pipeline_mode = #tpu.pipeline_mode<synchronous>, transform_indices = @transform_10, window_bounds = array<i64: 1, 4>}, {pipeline_mode = #tpu.pipeline_mode<synchronous>, transform_indices = @transform_11, window_bounds = array<i64: 1, 4>}, {pipeline_mode = #tpu.pipeline_mode<synchronous>, transform_indices = @transform_12, window_bounds = array<i64: 1, 4>}, {pipeline_mode = #tpu.pipeline_mode<synchronous>, transform_indices = @transform_13, window_bounds = array<i64: 1, 4>}, {pipeline_mode = #tpu.pipeline_mode<synchronous>, transform_indices = @transform_14, window_bounds = array<i64: 1, 4>}, {pipeline_mode = #tpu.pipeline_mode<synchronous>, transform_indices = @transform_15, window_bounds = array<i64: 4, 128>}, {pipeline_mode = #tpu.pipeline_mode<synchronous>, transform_indices = @transform_16, window_bounds = array<i64: 4, 128>}, {pipeline_mode = #tpu.pipeline_mode<synchronous>, transform_indices = @transform_17, window_bounds = array<i64: 4, 128>}, {pipeline_mode = #tpu.pipeline_mode<synchronous>, transform_indices = @transform_18, window_bounds = array<i64: 1, 128>}, {transform_indices = @transform_19, window_bounds = array<i64: 18, 128>}]} {
    %c0 = arith.constant 0 : index
    %c0_0 = arith.constant 0 : index
    %0 = vector.load %arg1[%c0, %c0_0] : memref<18x4xbf16, #tpu.memory_space<vmem>>, vector<18x4xbf16>
    %c0_1 = arith.constant 0 : index
    %c0_2 = arith.constant 0 : index
    %1 = vector.load %arg4[%c0_1, %c0_2] : memref<4x4xbf16, #tpu.memory_space<vmem>>, vector<4x4xbf16>
    %cst = arith.constant dense<0.000000e+00> : vector<18x4xf32>
    %2 = tpu.matmul %0, %1, %cst {dimension_numbers = #tpu.dot_dimension_numbers<[1], [0], [0], [1], [0, 0, 1, 1], [], []>} : vector<18x4xbf16>, vector<4x4xbf16>, vector<18x4xf32> -> vector<18x4xf32>
    %c0_3 = arith.constant 0 : index
    %c0_4 = arith.constant 0 : index
    %3 = vector.load %arg5[%c0_3, %c0_4] : memref<1x4xf32, #tpu.memory_space<vmem>>, vector<1x4xf32>
    %4 = vector.broadcast %3 : vector<1x4xf32> to vector<18x4xf32>
    %5 = arith.addf %2, %4 : vector<18x4xf32>
    %cst_5 = arith.constant 0.000000e+00 : f32
    %6 = vector.broadcast %cst_5 : f32 to vector<18x4xf32>
    %7 = arith.maximumf %5, %6 : vector<18x4xf32>
    %c0_6 = arith.constant 0 : index
    %c0_7 = arith.constant 0 : index
    %8 = vector.load %arg2[%c0_6, %c0_7] : memref<18x8xbf16, #tpu.memory_space<vmem>>, vector<18x8xbf16>
    %c0_8 = arith.constant 0 : index
    %c0_9 = arith.constant 0 : index
    %9 = vector.load %arg6[%c0_8, %c0_9] : memref<8x4xbf16, #tpu.memory_space<vmem>>, vector<8x4xbf16>
    %cst_10 = arith.constant dense<0.000000e+00> : vector<18x4xf32>
    %10 = tpu.matmul %8, %9, %cst_10 {dimension_numbers = #tpu.dot_dimension_numbers<[1], [0], [0], [1], [0, 0, 1, 1], [], []>} : vector<18x8xbf16>, vector<8x4xbf16>, vector<18x4xf32> -> vector<18x4xf32>
    %c0_11 = arith.constant 0 : index
    %c0_12 = arith.constant 0 : index
    %11 = vector.load %arg7[%c0_11, %c0_12] : memref<1x4xf32, #tpu.memory_space<vmem>>, vector<1x4xf32>
    %12 = vector.broadcast %11 : vector<1x4xf32> to vector<18x4xf32>
    %13 = arith.addf %10, %12 : vector<18x4xf32>
    %cst_13 = arith.constant 0.000000e+00 : f32
    %14 = vector.broadcast %cst_13 : f32 to vector<18x4xf32>
    %15 = arith.maximumf %13, %14 : vector<18x4xf32>
    %c0_14 = arith.constant 0 : index
    %c0_15 = arith.constant 0 : index
    %16 = vector.load %arg3[%c0_14, %c0_15] : memref<18x16xbf16, #tpu.memory_space<vmem>>, vector<18x16xbf16>
    %c0_16 = arith.constant 0 : index
    %c0_17 = arith.constant 0 : index
    %17 = vector.load %arg8[%c0_16, %c0_17] : memref<16x4xbf16, #tpu.memory_space<vmem>>, vector<16x4xbf16>
    %cst_18 = arith.constant dense<0.000000e+00> : vector<18x4xf32>
    %18 = tpu.matmul %16, %17, %cst_18 {dimension_numbers = #tpu.dot_dimension_numbers<[1], [0], [0], [1], [0, 0, 1, 1], [], []>} : vector<18x16xbf16>, vector<16x4xbf16>, vector<18x4xf32> -> vector<18x4xf32>
    %c0_19 = arith.constant 0 : index
    %c0_20 = arith.constant 0 : index
    %19 = vector.load %arg9[%c0_19, %c0_20] : memref<1x4xf32, #tpu.memory_space<vmem>>, vector<1x4xf32>
    %20 = vector.broadcast %19 : vector<1x4xf32> to vector<18x4xf32>
    %21 = arith.addf %18, %20 : vector<18x4xf32>
    %cst_21 = arith.constant 0.000000e+00 : f32
    %22 = vector.broadcast %cst_21 : f32 to vector<18x4xf32>
    %23 = arith.maximumf %21, %22 : vector<18x4xf32>
    %cst_22 = arith.constant dense<0.000000e+00> : vector<18xf32>
    %24 = vector.multi_reduction <add>, %7, %cst_22 [1] : vector<18x4xf32> to vector<18xf32>
    %25 = vector.shape_cast %24 : vector<18xf32> to vector<18x1xf32>
    %cst_23 = arith.constant dense<0.000000e+00> : vector<18xf32>
    %26 = vector.multi_reduction <add>, %15, %cst_23 [1] : vector<18x4xf32> to vector<18xf32>
    %27 = vector.shape_cast %26 : vector<18xf32> to vector<18x1xf32>
    %28 = arith.addf %25, %27 : vector<18x1xf32>
    %cst_24 = arith.constant dense<0.000000e+00> : vector<18xf32>
    %29 = vector.multi_reduction <add>, %23, %cst_24 [1] : vector<18x4xf32> to vector<18xf32>
    %30 = vector.shape_cast %29 : vector<18xf32> to vector<18x1xf32>
    %31 = arith.addf %28, %30 : vector<18x1xf32>
    %32 = arith.mulf %7, %7 : vector<18x4xf32>
    %cst_25 = arith.constant dense<0.000000e+00> : vector<18xf32>
    %33 = vector.multi_reduction <add>, %32, %cst_25 [1] : vector<18x4xf32> to vector<18xf32>
    %34 = vector.shape_cast %33 : vector<18xf32> to vector<18x1xf32>
    %35 = arith.mulf %15, %15 : vector<18x4xf32>
    %cst_26 = arith.constant dense<0.000000e+00> : vector<18xf32>
    %36 = vector.multi_reduction <add>, %35, %cst_26 [1] : vector<18x4xf32> to vector<18xf32>
    %37 = vector.shape_cast %36 : vector<18xf32> to vector<18x1xf32>
    %38 = arith.addf %34, %37 : vector<18x1xf32>
    %39 = arith.mulf %23, %23 : vector<18x4xf32>
    %cst_27 = arith.constant dense<0.000000e+00> : vector<18xf32>
    %40 = vector.multi_reduction <add>, %39, %cst_27 [1] : vector<18x4xf32> to vector<18xf32>
    %41 = vector.shape_cast %40 : vector<18xf32> to vector<18x1xf32>
    %42 = arith.addf %38, %41 : vector<18x1xf32>
    %cst_28 = arith.constant 0.0833333358 : f32
    %43 = vector.broadcast %cst_28 : f32 to vector<18x1xf32>
    %44 = arith.mulf %31, %43 : vector<18x1xf32>
    %cst_29 = arith.constant 0.0833333358 : f32
    %45 = vector.broadcast %cst_29 : f32 to vector<18x1xf32>
    %46 = arith.mulf %42, %45 : vector<18x1xf32>
    %47 = arith.mulf %44, %44 : vector<18x1xf32>
    %48 = arith.subf %46, %47 : vector<18x1xf32>
    %cst_30 = arith.constant 9.99999974E-6 : f32
    %49 = vector.broadcast %cst_30 : f32 to vector<18x1xf32>
    %50 = arith.addf %48, %49 : vector<18x1xf32>
    %51 = math.rsqrt %50 : vector<18x1xf32>
    %52 = vector.broadcast %44 : vector<18x1xf32> to vector<18x4xf32>
    %53 = arith.subf %7, %52 : vector<18x4xf32>
    %54 = vector.broadcast %51 : vector<18x1xf32> to vector<18x4xf32>
    %55 = arith.mulf %53, %54 : vector<18x4xf32>
    %c0_31 = arith.constant 0 : index
    %c0_32 = arith.constant 0 : index
    %56 = vector.load %arg10[%c0_31, %c0_32] : memref<1x4xf32, #tpu.memory_space<vmem>>, vector<1x4xf32>
    %57 = vector.broadcast %56 : vector<1x4xf32> to vector<18x4xf32>
    %58 = arith.mulf %55, %57 : vector<18x4xf32>
    %c0_33 = arith.constant 0 : index
    %c0_34 = arith.constant 0 : index
    %59 = vector.load %arg13[%c0_33, %c0_34] : memref<1x4xf32, #tpu.memory_space<vmem>>, vector<1x4xf32>
    %60 = vector.broadcast %59 : vector<1x4xf32> to vector<18x4xf32>
    %61 = arith.addf %58, %60 : vector<18x4xf32>
    %62 = arith.truncf %61 : vector<18x4xf32> to vector<18x4xbf16>
    %c0_35 = arith.constant 0 : index
    %c0_36 = arith.constant 0 : index
    %63 = vector.load %arg16[%c0_35, %c0_36] : memref<4x128xbf16, #tpu.memory_space<vmem>>, vector<4x128xbf16>
    %cst_37 = arith.constant dense<0.000000e+00> : vector<18x128xf32>
    %64 = tpu.matmul %62, %63, %cst_37 {dimension_numbers = #tpu.dot_dimension_numbers<[1], [0], [0], [1], [0, 0, 1, 1], [], []>} : vector<18x4xbf16>, vector<4x128xbf16>, vector<18x128xf32> -> vector<18x128xf32>
    %65 = vector.broadcast %44 : vector<18x1xf32> to vector<18x4xf32>
    %66 = arith.subf %15, %65 : vector<18x4xf32>
    %67 = vector.broadcast %51 : vector<18x1xf32> to vector<18x4xf32>
    %68 = arith.mulf %66, %67 : vector<18x4xf32>
    %c0_38 = arith.constant 0 : index
    %c0_39 = arith.constant 0 : index
    %69 = vector.load %arg11[%c0_38, %c0_39] : memref<1x4xf32, #tpu.memory_space<vmem>>, vector<1x4xf32>
    %70 = vector.broadcast %69 : vector<1x4xf32> to vector<18x4xf32>
    %71 = arith.mulf %68, %70 : vector<18x4xf32>
    %c0_40 = arith.constant 0 : index
    %c0_41 = arith.constant 0 : index
    %72 = vector.load %arg14[%c0_40, %c0_41] : memref<1x4xf32, #tpu.memory_space<vmem>>, vector<1x4xf32>
    %73 = vector.broadcast %72 : vector<1x4xf32> to vector<18x4xf32>
    %74 = arith.addf %71, %73 : vector<18x4xf32>
    %75 = arith.truncf %74 : vector<18x4xf32> to vector<18x4xbf16>
    %c0_42 = arith.constant 0 : index
    %c0_43 = arith.constant 0 : index
    %76 = vector.load %arg17[%c0_42, %c0_43] : memref<4x128xbf16, #tpu.memory_space<vmem>>, vector<4x128xbf16>
    %cst_44 = arith.constant dense<0.000000e+00> : vector<18x128xf32>
    %77 = tpu.matmul %75, %76, %cst_44 {dimension_numbers = #tpu.dot_dimension_numbers<[1], [0], [0], [1], [0, 0, 1, 1], [], []>} : vector<18x4xbf16>, vector<4x128xbf16>, vector<18x128xf32> -> vector<18x128xf32>
    %78 = arith.addf %64, %77 : vector<18x128xf32>
    %79 = vector.broadcast %44 : vector<18x1xf32> to vector<18x4xf32>
    %80 = arith.subf %23, %79 : vector<18x4xf32>
    %81 = vector.broadcast %51 : vector<18x1xf32> to vector<18x4xf32>
    %82 = arith.mulf %80, %81 : vector<18x4xf32>
    %c0_45 = arith.constant 0 : index
    %c0_46 = arith.constant 0 : index
    %83 = vector.load %arg12[%c0_45, %c0_46] : memref<1x4xf32, #tpu.memory_space<vmem>>, vector<1x4xf32>
    %84 = vector.broadcast %83 : vector<1x4xf32> to vector<18x4xf32>
    %85 = arith.mulf %82, %84 : vector<18x4xf32>
    %c0_47 = arith.constant 0 : index
    %c0_48 = arith.constant 0 : index
    %86 = vector.load %arg15[%c0_47, %c0_48] : memref<1x4xf32, #tpu.memory_space<vmem>>, vector<1x4xf32>
    %87 = vector.broadcast %86 : vector<1x4xf32> to vector<18x4xf32>
    %88 = arith.addf %85, %87 : vector<18x4xf32>
    %89 = arith.truncf %88 : vector<18x4xf32> to vector<18x4xbf16>
    %c0_49 = arith.constant 0 : index
    %c0_50 = arith.constant 0 : index
    %90 = vector.load %arg18[%c0_49, %c0_50] : memref<4x128xbf16, #tpu.memory_space<vmem>>, vector<4x128xbf16>
    %cst_51 = arith.constant dense<0.000000e+00> : vector<18x128xf32>
    %91 = tpu.matmul %89, %90, %cst_51 {dimension_numbers = #tpu.dot_dimension_numbers<[1], [0], [0], [1], [0, 0, 1, 1], [], []>} : vector<18x4xbf16>, vector<4x128xbf16>, vector<18x128xf32> -> vector<18x128xf32>
    %92 = arith.addf %78, %91 : vector<18x128xf32>
    %c0_52 = arith.constant 0 : index
    %c0_53 = arith.constant 0 : index
    %93 = vector.load %arg19[%c0_52, %c0_53] : memref<1x128xf32, #tpu.memory_space<vmem>>, vector<1x128xf32>
    %94 = vector.broadcast %93 : vector<1x128xf32> to vector<18x128xf32>
    %95 = arith.addf %92, %94 : vector<18x128xf32>
    %96 = arith.truncf %95 : vector<18x128xf32> to vector<18x128xbf16>
    %c0_54 = arith.constant 0 : index
    %c0_55 = arith.constant 0 : index
    %97 = vector.load %arg20[%c0_54, %c0_55] : memref<18x128xbf16, #tpu.memory_space<vmem>>, vector<18x128xbf16>
    tpu.vector_store %arg20[%c0_54, %c0_55], %96 {strides = array<i32>} : memref<18x128xbf16, #tpu.memory_space<vmem>>, vector<18x128xbf16>,
    return
  }
  func.func @transform_0(%arg0: i32) -> (i32, i32) {
    %c0_i32 = arith.constant 0 : i32
    %c0_i32_0 = arith.constant 0 : i32
    return %arg0, %c0_i32 : i32, i32
  }
  func.func @transform_1(%arg0: i32) -> (i32, i32) {
    %c0_i32 = arith.constant 0 : i32
    %c0_i32_0 = arith.constant 0 : i32
    return %arg0, %c0_i32 : i32, i32
  }
  func.func @transform_2(%arg0: i32) -> (i32, i32) {
    %c0_i32 = arith.constant 0 : i32
    %c0_i32_0 = arith.constant 0 : i32
    return %arg0, %c0_i32 : i32, i32
  }
  func.func @transform_3(%arg0: i32) -> (i32, i32) {
    %c0_i32 = arith.constant 0 : i32
    %c0_i32_0 = arith.constant 0 : i32
    %c0_i32_1 = arith.constant 0 : i32
    return %c0_i32, %c0_i32_0 : i32, i32
  }
  func.func @transform_4(%arg0: i32) -> (i32, i32) {
    %c0_i32 = arith.constant 0 : i32
    %c0_i32_0 = arith.constant 0 : i32
    %c0_i32_1 = arith.constant 0 : i32
    return %c0_i32, %c0_i32_0 : i32, i32
  }
  func.func @transform_5(%arg0: i32) -> (i32, i32) {
    %c0_i32 = arith.constant 0 : i32
    %c0_i32_0 = arith.constant 0 : i32
    %c0_i32_1 = arith.constant 0 : i32
    return %c0_i32, %c0_i32_0 : i32, i32
  }
  func.func @transform_6(%arg0: i32) -> (i32, i32) {
    %c0_i32 = arith.constant 0 : i32
    %c0_i32_0 = arith.constant 0 : i32
    %c0_i32_1 = arith.constant 0 : i32
    return %c0_i32, %c0_i32_0 : i32, i32
  }
  func.func @transform_7(%arg0: i32) -> (i32, i32) {
    %c0_i32 = arith.constant 0 : i32
    %c0_i32_0 = arith.constant 0 : i32
    %c0_i32_1 = arith.constant 0 : i32
    return %c0_i32, %c0_i32_0 : i32, i32
  }
  func.func @transform_8(%arg0: i32) -> (i32, i32) {
    %c0_i32 = arith.constant 0 : i32
    %c0_i32_0 = arith.constant 0 : i32
    %c0_i32_1 = arith.constant 0 : i32
    return %c0_i32, %c0_i32_0 : i32, i32
  }
  func.func @transform_9(%arg0: i32) -> (i32, i32) {
    %c0_i32 = arith.constant 0 : i32
    %c0_i32_0 = arith.constant 0 : i32
    %c0_i32_1 = arith.constant 0 : i32
    return %c0_i32, %c0_i32_0 : i32, i32
  }
  func.func @transform_10(%arg0: i32) -> (i32, i32) {
    %c0_i32 = arith.constant 0 : i32
    %c0_i32_0 = arith.constant 0 : i32
    %c0_i32_1 = arith.constant 0 : i32
    return %c0_i32, %c0_i32_0 : i32, i32
  }
  func.func @transform_11(%arg0: i32) -> (i32, i32) {
    %c0_i32 = arith.constant 0 : i32
    %c0_i32_0 = arith.constant 0 : i32
    %c0_i32_1 = arith.constant 0 : i32
    return %c0_i32, %c0_i32_0 : i32, i32
  }
  func.func @transform_12(%arg0: i32) -> (i32, i32) {
    %c0_i32 = arith.constant 0 : i32
    %c0_i32_0 = arith.constant 0 : i32
    %c0_i32_1 = arith.constant 0 : i32
    return %c0_i32, %c0_i32_0 : i32, i32
  }
  func.func @transform_13(%arg0: i32) -> (i32, i32) {
    %c0_i32 = arith.constant 0 : i32
    %c0_i32_0 = arith.constant 0 : i32
    %c0_i32_1 = arith.constant 0 : i32
    return %c0_i32, %c0_i32_0 : i32, i32
  }
  func.func @transform_14(%arg0: i32) -> (i32, i32) {
    %c0_i32 = arith.constant 0 : i32
    %c0_i32_0 = arith.constant 0 : i32
    %c0_i32_1 = arith.constant 0 : i32
    return %c0_i32, %c0_i32_0 : i32, i32
  }
  func.func @transform_15(%arg0: i32) -> (i32, i32) {
    %c0_i32 = arith.constant 0 : i32
    %c0_i32_0 = arith.constant 0 : i32
    %c0_i32_1 = arith.constant 0 : i32
    return %c0_i32, %c0_i32_0 : i32, i32
  }
  func.func @transform_16(%arg0: i32) -> (i32, i32) {
    %c0_i32 = arith.constant 0 : i32
    %c0_i32_0 = arith.constant 0 : i32
    %c0_i32_1 = arith.constant 0 : i32
    return %c0_i32, %c0_i32_0 : i32, i32
  }
  func.func @transform_17(%arg0: i32) -> (i32, i32) {
    %c0_i32 = arith.constant 0 : i32
    %c0_i32_0 = arith.constant 0 : i32
    %c0_i32_1 = arith.constant 0 : i32
    return %c0_i32, %c0_i32_0 : i32, i32
  }
  func.func @transform_18(%arg0: i32) -> (i32, i32) {
    %c0_i32 = arith.constant 0 : i32
    %c0_i32_0 = arith.constant 0 : i32
    %c0_i32_1 = arith.constant 0 : i32
    return %c0_i32, %c0_i32_0 : i32, i32
  }
  func.func @transform_19(%arg0: i32) -> (i32, i32) {
    %c0_i32 = arith.constant 0 : i32
    %c0_i32_0 = arith.constant 0 : i32
    return %arg0, %c0_i32 : i32, i32
  }
}

module attributes {stable_mosaic.version = 11 : i64} {
  func.func @_speaker_kernel(%arg0: memref<18x128xbf16, #tpu.memory_space<vmem>>, %arg1: memref<2x128x128xbf16, #tpu.memory_space<vmem>>, %arg2: memref<2x128xf32, #tpu.memory_space<vmem>>, %arg3: memref<2x128xf32, #tpu.memory_space<vmem>>, %arg4: memref<2x128xf32, #tpu.memory_space<vmem>>, %arg5: memref<2x1xf32, #tpu.memory_space<vmem>>, %arg6: memref<2x128x128xbf16, #tpu.memory_space<vmem>>, %arg7: memref<2x128xf32, #tpu.memory_space<vmem>>, %arg8: memref<2x128xf32, #tpu.memory_space<vmem>>, %arg9: memref<2x128xf32, #tpu.memory_space<vmem>>, %arg10: memref<2x1xf32, #tpu.memory_space<vmem>>, %arg11: memref<128x128xbf16, #tpu.memory_space<vmem>>, %arg12: memref<1x128xf32, #tpu.memory_space<vmem>>, %arg13: memref<128x5xbf16, #tpu.memory_space<vmem>>, %arg14: memref<1x5xf32, #tpu.memory_space<vmem>>, %arg15: memref<2x5xf32, #tpu.memory_space<vmem>>) attributes {dimension_semantics = [], scalar_prefetch = 0 : i64, scratch_operands = 0 : i64, tpu.core_type = #tpu.core_type<tc>} {
    %c0 = arith.constant 0 : index
    %c0_0 = arith.constant 0 : index
    %0 = vector.load %arg0[%c0, %c0_0] : memref<18x128xbf16, #tpu.memory_space<vmem>>, vector<18x128xbf16>
    %c0_1 = arith.constant 0 : index
    %c0_2 = arith.constant 0 : index
    %c0_3 = arith.constant 0 : index
    %1 = vector.load %arg1[%c0_1, %c0_2, %c0_3] : memref<2x128x128xbf16, #tpu.memory_space<vmem>>, vector<1x128x128xbf16>
    %2 = vector.shape_cast %1 : vector<1x128x128xbf16> to vector<128x128xbf16>
    %cst = arith.constant dense<0.000000e+00> : vector<18x128xf32>
    %3 = tpu.matmul %0, %2, %cst {dimension_numbers = #tpu.dot_dimension_numbers<[1], [0], [0], [1], [0, 0, 1, 1], [], []>} : vector<18x128xbf16>, vector<128x128xbf16>, vector<18x128xf32> -> vector<18x128xf32>
    %c0_4 = arith.constant 0 : index
    %c0_5 = arith.constant 0 : index
    %4 = vector.load %arg2[%c0_4, %c0_5] : memref<2x128xf32, #tpu.memory_space<vmem>>, vector<1x128xf32>
    %5 = vector.broadcast %4 : vector<1x128xf32> to vector<18x128xf32>
    %6 = arith.addf %3, %5 : vector<18x128xf32>
    %c0_6 = arith.constant 0 : index
    %c0_7 = arith.constant 0 : index
    %7 = vector.load %arg3[%c0_6, %c0_7] : memref<2x128xf32, #tpu.memory_space<vmem>>, vector<1x128xf32>
    %c0_8 = arith.constant 0 : index
    %c0_9 = arith.constant 0 : index
    %8 = vector.load %arg4[%c0_8, %c0_9] : memref<2x128xf32, #tpu.memory_space<vmem>>, vector<1x128xf32>
    %cst_10 = arith.constant dense<0.000000e+00> : vector<128xf32>
    %9 = vector.multi_reduction <add>, %6, %cst_10 [0] : vector<18x128xf32> to vector<128xf32>
    %10 = vector.shape_cast %9 : vector<128xf32> to vector<1x128xf32>
    %11 = arith.mulf %6, %6 : vector<18x128xf32>
    %cst_11 = arith.constant dense<0.000000e+00> : vector<128xf32>
    %12 = vector.multi_reduction <add>, %11, %cst_11 [0] : vector<18x128xf32> to vector<128xf32>
    %13 = vector.shape_cast %12 : vector<128xf32> to vector<1x128xf32>
    %cst_12 = arith.constant 0.055555556 : f32
    %14 = vector.broadcast %cst_12 : f32 to vector<1x128xf32>
    %15 = arith.mulf %10, %14 : vector<1x128xf32>
    %cst_13 = arith.constant 0.055555556 : f32
    %16 = vector.broadcast %cst_13 : f32 to vector<1x128xf32>
    %17 = arith.mulf %13, %16 : vector<1x128xf32>
    %18 = arith.mulf %15, %15 : vector<1x128xf32>
    %19 = arith.subf %17, %18 : vector<1x128xf32>
    %cst_14 = arith.constant 9.99999974E-6 : f32
    %20 = vector.broadcast %cst_14 : f32 to vector<1x128xf32>
    %21 = arith.addf %19, %20 : vector<1x128xf32>
    %22 = math.rsqrt %21 : vector<1x128xf32>
    %23 = arith.mulf %7, %22 : vector<1x128xf32>
    %24 = arith.mulf %15, %23 : vector<1x128xf32>
    %25 = arith.subf %8, %24 : vector<1x128xf32>
    %26 = vector.broadcast %23 : vector<1x128xf32> to vector<18x128xf32>
    %27 = arith.mulf %6, %26 : vector<18x128xf32>
    %28 = vector.broadcast %25 : vector<1x128xf32> to vector<18x128xf32>
    %29 = arith.addf %27, %28 : vector<18x128xf32>
    %c0_15 = arith.constant 0 : index
    %c0_16 = arith.constant 0 : index
    %30 = vector.load %arg5[%c0_15, %c0_16] : memref<2x1xf32, #tpu.memory_space<vmem>>, vector<1x1xf32>
    %cst_17 = arith.constant 0.000000e+00 : f32
    %31 = vector.broadcast %cst_17 : f32 to vector<18x128xf32>
    %32 = arith.cmpf ogt, %29, %31 : vector<18x128xf32>
    %33 = vector.broadcast %30 : vector<1x1xf32> to vector<18x128xf32>
    %34 = arith.mulf %33, %29 : vector<18x128xf32>
    %35 = arith.select %32, %29, %34 : vector<18x128xi1>, vector<18x128xf32>
    %36 = arith.truncf %35 : vector<18x128xf32> to vector<18x128xbf16>
    %c0_18 = arith.constant 0 : index
    %c0_19 = arith.constant 0 : index
    %c0_20 = arith.constant 0 : index
    %37 = vector.load %arg6[%c0_18, %c0_19, %c0_20] : memref<2x128x128xbf16, #tpu.memory_space<vmem>>, vector<1x128x128xbf16>
    %38 = vector.shape_cast %37 : vector<1x128x128xbf16> to vector<128x128xbf16>
    %cst_21 = arith.constant dense<0.000000e+00> : vector<18x128xf32>
    %39 = tpu.matmul %36, %38, %cst_21 {dimension_numbers = #tpu.dot_dimension_numbers<[1], [0], [0], [1], [0, 0, 1, 1], [], []>} : vector<18x128xbf16>, vector<128x128xbf16>, vector<18x128xf32> -> vector<18x128xf32>
    %c0_22 = arith.constant 0 : index
    %c0_23 = arith.constant 0 : index
    %40 = vector.load %arg7[%c0_22, %c0_23] : memref<2x128xf32, #tpu.memory_space<vmem>>, vector<1x128xf32>
    %41 = vector.broadcast %40 : vector<1x128xf32> to vector<18x128xf32>
    %42 = arith.addf %39, %41 : vector<18x128xf32>
    %c0_24 = arith.constant 0 : index
    %c0_25 = arith.constant 0 : index
    %43 = vector.load %arg8[%c0_24, %c0_25] : memref<2x128xf32, #tpu.memory_space<vmem>>, vector<1x128xf32>
    %c0_26 = arith.constant 0 : index
    %c0_27 = arith.constant 0 : index
    %44 = vector.load %arg9[%c0_26, %c0_27] : memref<2x128xf32, #tpu.memory_space<vmem>>, vector<1x128xf32>
    %cst_28 = arith.constant dense<0.000000e+00> : vector<128xf32>
    %45 = vector.multi_reduction <add>, %42, %cst_28 [0] : vector<18x128xf32> to vector<128xf32>
    %46 = vector.shape_cast %45 : vector<128xf32> to vector<1x128xf32>
    %47 = arith.mulf %42, %42 : vector<18x128xf32>
    %cst_29 = arith.constant dense<0.000000e+00> : vector<128xf32>
    %48 = vector.multi_reduction <add>, %47, %cst_29 [0] : vector<18x128xf32> to vector<128xf32>
    %49 = vector.shape_cast %48 : vector<128xf32> to vector<1x128xf32>
    %cst_30 = arith.constant 0.055555556 : f32
    %50 = vector.broadcast %cst_30 : f32 to vector<1x128xf32>
    %51 = arith.mulf %46, %50 : vector<1x128xf32>
    %cst_31 = arith.constant 0.055555556 : f32
    %52 = vector.broadcast %cst_31 : f32 to vector<1x128xf32>
    %53 = arith.mulf %49, %52 : vector<1x128xf32>
    %54 = arith.mulf %51, %51 : vector<1x128xf32>
    %55 = arith.subf %53, %54 : vector<1x128xf32>
    %cst_32 = arith.constant 9.99999974E-6 : f32
    %56 = vector.broadcast %cst_32 : f32 to vector<1x128xf32>
    %57 = arith.addf %55, %56 : vector<1x128xf32>
    %58 = math.rsqrt %57 : vector<1x128xf32>
    %59 = arith.mulf %43, %58 : vector<1x128xf32>
    %60 = arith.mulf %51, %59 : vector<1x128xf32>
    %61 = arith.subf %44, %60 : vector<1x128xf32>
    %62 = vector.broadcast %59 : vector<1x128xf32> to vector<18x128xf32>
    %63 = arith.mulf %42, %62 : vector<18x128xf32>
    %64 = vector.broadcast %61 : vector<1x128xf32> to vector<18x128xf32>
    %65 = arith.addf %63, %64 : vector<18x128xf32>
    %66 = arith.extf %0 : vector<18x128xbf16> to vector<18x128xf32>
    %67 = arith.addf %66, %65 : vector<18x128xf32>
    %c0_33 = arith.constant 0 : index
    %c0_34 = arith.constant 0 : index
    %68 = vector.load %arg10[%c0_33, %c0_34] : memref<2x1xf32, #tpu.memory_space<vmem>>, vector<1x1xf32>
    %cst_35 = arith.constant 0.000000e+00 : f32
    %69 = vector.broadcast %cst_35 : f32 to vector<18x128xf32>
    %70 = arith.cmpf ogt, %67, %69 : vector<18x128xf32>
    %71 = vector.broadcast %68 : vector<1x1xf32> to vector<18x128xf32>
    %72 = arith.mulf %71, %67 : vector<18x128xf32>
    %73 = arith.select %70, %67, %72 : vector<18x128xi1>, vector<18x128xf32>
    %74 = vector.shape_cast %73 : vector<18x128xf32> to vector<6x3x128xf32>
    %cst_36 = arith.constant dense<0xFF800000> : vector<6x128xf32>
    %75 = vector.multi_reduction <maximumf>, %74, %cst_36 [1] : vector<6x3x128xf32> to vector<6x128xf32>
    %76 = arith.truncf %75 : vector<6x128xf32> to vector<6x128xbf16>
    %c1 = arith.constant 1 : index
    %c0_37 = arith.constant 0 : index
    %c0_38 = arith.constant 0 : index
    %77 = vector.load %arg1[%c1, %c0_37, %c0_38] : memref<2x128x128xbf16, #tpu.memory_space<vmem>>, vector<1x128x128xbf16>
    %78 = vector.shape_cast %77 : vector<1x128x128xbf16> to vector<128x128xbf16>
    %cst_39 = arith.constant dense<0.000000e+00> : vector<6x128xf32>
    %79 = tpu.matmul %76, %78, %cst_39 {dimension_numbers = #tpu.dot_dimension_numbers<[1], [0], [0], [1], [0, 0, 1, 1], [], []>} : vector<6x128xbf16>, vector<128x128xbf16>, vector<6x128xf32> -> vector<6x128xf32>
    %c1_40 = arith.constant 1 : index
    %c0_41 = arith.constant 0 : index
    %80 = vector.load %arg2[%c1_40, %c0_41] : memref<2x128xf32, #tpu.memory_space<vmem>>, vector<1x128xf32>
    %81 = vector.broadcast %80 : vector<1x128xf32> to vector<6x128xf32>
    %82 = arith.addf %79, %81 : vector<6x128xf32>
    %c1_42 = arith.constant 1 : index
    %c0_43 = arith.constant 0 : index
    %83 = vector.load %arg3[%c1_42, %c0_43] : memref<2x128xf32, #tpu.memory_space<vmem>>, vector<1x128xf32>
    %c1_44 = arith.constant 1 : index
    %c0_45 = arith.constant 0 : index
    %84 = vector.load %arg4[%c1_44, %c0_45] : memref<2x128xf32, #tpu.memory_space<vmem>>, vector<1x128xf32>
    %cst_46 = arith.constant dense<0.000000e+00> : vector<128xf32>
    %85 = vector.multi_reduction <add>, %82, %cst_46 [0] : vector<6x128xf32> to vector<128xf32>
    %86 = vector.shape_cast %85 : vector<128xf32> to vector<1x128xf32>
    %87 = arith.mulf %82, %82 : vector<6x128xf32>
    %cst_47 = arith.constant dense<0.000000e+00> : vector<128xf32>
    %88 = vector.multi_reduction <add>, %87, %cst_47 [0] : vector<6x128xf32> to vector<128xf32>
    %89 = vector.shape_cast %88 : vector<128xf32> to vector<1x128xf32>
    %cst_48 = arith.constant 0.166666672 : f32
    %90 = vector.broadcast %cst_48 : f32 to vector<1x128xf32>
    %91 = arith.mulf %86, %90 : vector<1x128xf32>
    %cst_49 = arith.constant 0.166666672 : f32
    %92 = vector.broadcast %cst_49 : f32 to vector<1x128xf32>
    %93 = arith.mulf %89, %92 : vector<1x128xf32>
    %94 = arith.mulf %91, %91 : vector<1x128xf32>
    %95 = arith.subf %93, %94 : vector<1x128xf32>
    %cst_50 = arith.constant 9.99999974E-6 : f32
    %96 = vector.broadcast %cst_50 : f32 to vector<1x128xf32>
    %97 = arith.addf %95, %96 : vector<1x128xf32>
    %98 = math.rsqrt %97 : vector<1x128xf32>
    %99 = arith.mulf %83, %98 : vector<1x128xf32>
    %100 = arith.mulf %91, %99 : vector<1x128xf32>
    %101 = arith.subf %84, %100 : vector<1x128xf32>
    %102 = vector.broadcast %99 : vector<1x128xf32> to vector<6x128xf32>
    %103 = arith.mulf %82, %102 : vector<6x128xf32>
    %104 = vector.broadcast %101 : vector<1x128xf32> to vector<6x128xf32>
    %105 = arith.addf %103, %104 : vector<6x128xf32>
    %c1_51 = arith.constant 1 : index
    %c0_52 = arith.constant 0 : index
    %106 = vector.load %arg5[%c1_51, %c0_52] : memref<2x1xf32, #tpu.memory_space<vmem>>, vector<1x1xf32>
    %cst_53 = arith.constant 0.000000e+00 : f32
    %107 = vector.broadcast %cst_53 : f32 to vector<6x128xf32>
    %108 = arith.cmpf ogt, %105, %107 : vector<6x128xf32>
    %109 = vector.broadcast %106 : vector<1x1xf32> to vector<6x128xf32>
    %110 = arith.mulf %109, %105 : vector<6x128xf32>
    %111 = arith.select %108, %105, %110 : vector<6x128xi1>, vector<6x128xf32>
    %112 = arith.truncf %111 : vector<6x128xf32> to vector<6x128xbf16>
    %c1_54 = arith.constant 1 : index
    %c0_55 = arith.constant 0 : index
    %c0_56 = arith.constant 0 : index
    %113 = vector.load %arg6[%c1_54, %c0_55, %c0_56] : memref<2x128x128xbf16, #tpu.memory_space<vmem>>, vector<1x128x128xbf16>
    %114 = vector.shape_cast %113 : vector<1x128x128xbf16> to vector<128x128xbf16>
    %cst_57 = arith.constant dense<0.000000e+00> : vector<6x128xf32>
    %115 = tpu.matmul %112, %114, %cst_57 {dimension_numbers = #tpu.dot_dimension_numbers<[1], [0], [0], [1], [0, 0, 1, 1], [], []>} : vector<6x128xbf16>, vector<128x128xbf16>, vector<6x128xf32> -> vector<6x128xf32>
    %c1_58 = arith.constant 1 : index
    %c0_59 = arith.constant 0 : index
    %116 = vector.load %arg7[%c1_58, %c0_59] : memref<2x128xf32, #tpu.memory_space<vmem>>, vector<1x128xf32>
    %117 = vector.broadcast %116 : vector<1x128xf32> to vector<6x128xf32>
    %118 = arith.addf %115, %117 : vector<6x128xf32>
    %c1_60 = arith.constant 1 : index
    %c0_61 = arith.constant 0 : index
    %119 = vector.load %arg8[%c1_60, %c0_61] : memref<2x128xf32, #tpu.memory_space<vmem>>, vector<1x128xf32>
    %c1_62 = arith.constant 1 : index
    %c0_63 = arith.constant 0 : index
    %120 = vector.load %arg9[%c1_62, %c0_63] : memref<2x128xf32, #tpu.memory_space<vmem>>, vector<1x128xf32>
    %cst_64 = arith.constant dense<0.000000e+00> : vector<128xf32>
    %121 = vector.multi_reduction <add>, %118, %cst_64 [0] : vector<6x128xf32> to vector<128xf32>
    %122 = vector.shape_cast %121 : vector<128xf32> to vector<1x128xf32>
    %123 = arith.mulf %118, %118 : vector<6x128xf32>
    %cst_65 = arith.constant dense<0.000000e+00> : vector<128xf32>
    %124 = vector.multi_reduction <add>, %123, %cst_65 [0] : vector<6x128xf32> to vector<128xf32>
    %125 = vector.shape_cast %124 : vector<128xf32> to vector<1x128xf32>
    %cst_66 = arith.constant 0.166666672 : f32
    %126 = vector.broadcast %cst_66 : f32 to vector<1x128xf32>
    %127 = arith.mulf %122, %126 : vector<1x128xf32>
    %cst_67 = arith.constant 0.166666672 : f32
    %128 = vector.broadcast %cst_67 : f32 to vector<1x128xf32>
    %129 = arith.mulf %125, %128 : vector<1x128xf32>
    %130 = arith.mulf %127, %127 : vector<1x128xf32>
    %131 = arith.subf %129, %130 : vector<1x128xf32>
    %cst_68 = arith.constant 9.99999974E-6 : f32
    %132 = vector.broadcast %cst_68 : f32 to vector<1x128xf32>
    %133 = arith.addf %131, %132 : vector<1x128xf32>
    %134 = math.rsqrt %133 : vector<1x128xf32>
    %135 = arith.mulf %119, %134 : vector<1x128xf32>
    %136 = arith.mulf %127, %135 : vector<1x128xf32>
    %137 = arith.subf %120, %136 : vector<1x128xf32>
    %138 = vector.broadcast %135 : vector<1x128xf32> to vector<6x128xf32>
    %139 = arith.mulf %118, %138 : vector<6x128xf32>
    %140 = vector.broadcast %137 : vector<1x128xf32> to vector<6x128xf32>
    %141 = arith.addf %139, %140 : vector<6x128xf32>
    %142 = arith.extf %76 : vector<6x128xbf16> to vector<6x128xf32>
    %143 = arith.addf %142, %141 : vector<6x128xf32>
    %c1_69 = arith.constant 1 : index
    %c0_70 = arith.constant 0 : index
    %144 = vector.load %arg10[%c1_69, %c0_70] : memref<2x1xf32, #tpu.memory_space<vmem>>, vector<1x1xf32>
    %cst_71 = arith.constant 0.000000e+00 : f32
    %145 = vector.broadcast %cst_71 : f32 to vector<6x128xf32>
    %146 = arith.cmpf ogt, %143, %145 : vector<6x128xf32>
    %147 = vector.broadcast %144 : vector<1x1xf32> to vector<6x128xf32>
    %148 = arith.mulf %147, %143 : vector<6x128xf32>
    %149 = arith.select %146, %143, %148 : vector<6x128xi1>, vector<6x128xf32>
    %150 = vector.shape_cast %149 : vector<6x128xf32> to vector<2x3x128xf32>
    %cst_72 = arith.constant dense<0xFF800000> : vector<2x128xf32>
    %151 = vector.multi_reduction <maximumf>, %150, %cst_72 [1] : vector<2x3x128xf32> to vector<2x128xf32>
    %152 = arith.truncf %151 : vector<2x128xf32> to vector<2x128xbf16>
    %c0_73 = arith.constant 0 : index
    %c0_74 = arith.constant 0 : index
    %153 = vector.load %arg11[%c0_73, %c0_74] : memref<128x128xbf16, #tpu.memory_space<vmem>>, vector<128x128xbf16>
    %cst_75 = arith.constant dense<0.000000e+00> : vector<2x128xf32>
    %154 = tpu.matmul %152, %153, %cst_75 {dimension_numbers = #tpu.dot_dimension_numbers<[1], [0], [0], [1], [0, 0, 1, 1], [], []>} : vector<2x128xbf16>, vector<128x128xbf16>, vector<2x128xf32> -> vector<2x128xf32>
    %c0_76 = arith.constant 0 : index
    %c0_77 = arith.constant 0 : index
    %155 = vector.load %arg12[%c0_76, %c0_77] : memref<1x128xf32, #tpu.memory_space<vmem>>, vector<1x128xf32>
    %156 = vector.broadcast %155 : vector<1x128xf32> to vector<2x128xf32>
    %157 = arith.addf %154, %156 : vector<2x128xf32>
    %158 = vector.shape_cast %157 : vector<2x128xf32> to vector<2x1x128xf32>
    %cst_78 = arith.constant dense<0.000000e+00> : vector<2x128xf32>
    %159 = vector.multi_reduction <add>, %158, %cst_78 [1] : vector<2x1x128xf32> to vector<2x128xf32>
    %cst_79 = arith.constant 1.000000e+00 : f32
    %160 = vector.broadcast %cst_79 : f32 to vector<2x128xf32>
    %161 = arith.divf %159, %160 : vector<2x128xf32>
    %162 = arith.truncf %161 : vector<2x128xf32> to vector<2x128xbf16>
    %c0_80 = arith.constant 0 : index
    %c0_81 = arith.constant 0 : index
    %163 = vector.load %arg13[%c0_80, %c0_81] : memref<128x5xbf16, #tpu.memory_space<vmem>>, vector<128x5xbf16>
    %cst_82 = arith.constant dense<0.000000e+00> : vector<2x5xf32>
    %164 = tpu.matmul %162, %163, %cst_82 {dimension_numbers = #tpu.dot_dimension_numbers<[1], [0], [0], [1], [0, 0, 1, 1], [], []>} : vector<2x128xbf16>, vector<128x5xbf16>, vector<2x5xf32> -> vector<2x5xf32>
    %c0_83 = arith.constant 0 : index
    %c0_84 = arith.constant 0 : index
    %165 = vector.load %arg14[%c0_83, %c0_84] : memref<1x5xf32, #tpu.memory_space<vmem>>, vector<1x5xf32>
    %166 = vector.broadcast %165 : vector<1x5xf32> to vector<2x5xf32>
    %167 = arith.addf %164, %166 : vector<2x5xf32>
    %c0_85 = arith.constant 0 : index
    %c0_86 = arith.constant 0 : index
    %168 = vector.load %arg15[%c0_85, %c0_86] : memref<2x5xf32, #tpu.memory_space<vmem>>, vector<2x5xf32>
    tpu.vector_store %arg15[%c0_85, %c0_86], %167 {strides = array<i32>} : memref<2x5xf32, #tpu.memory_space<vmem>>, vector<2x5xf32>,
    return
  }
}

</mosaic_0001>

<llo_original>
// kernel: _lambda_.2
$region0: #{_lambda_.2}
  #allocation0 [shape = 'u32[]', space=smem, size = 0x4, offset = 0x4, fixed_abs, tag = 'smem constant byte address 0x4 - core index']
  #allocation1 [shape = 'u32[72,128]{1,0:T(1,128)}', space=vmem, size = 0x9000, scoped, tag = 'internal scratch']
  %s0 = inlined_call_operand.vmem [shape: bf16[18,4], index: 0, kind: input, shape index: {}]
  %s1 = inlined_call_operand.vmem [shape: bf16[18,8], index: 1, kind: input, shape index: {}]
  %s2 = inlined_call_operand.vmem [shape: bf16[18,16], index: 2, kind: input, shape index: {}]
  %s3 = inlined_call_operand.vmem [shape: bf16[4,4], index: 3, kind: input, shape index: {}]
  %s4 = inlined_call_operand.vmem [shape: f32[1,4], index: 4, kind: input, shape index: {}]
  %s5 = inlined_call_operand.vmem [shape: bf16[8,4], index: 5, kind: input, shape index: {}]
  %s6 = inlined_call_operand.vmem [shape: f32[1,4], index: 6, kind: input, shape index: {}]
  %s7 = inlined_call_operand.vmem [shape: bf16[16,4], index: 7, kind: input, shape index: {}]
  %s8 = inlined_call_operand.vmem [shape: f32[1,4], index: 8, kind: input, shape index: {}]
  %s9 = inlined_call_operand.vmem [shape: f32[1,4], index: 9, kind: input, shape index: {}]
  %s10 = inlined_call_operand.vmem [shape: f32[1,4], index: 10, kind: input, shape index: {}]
  %s11 = inlined_call_operand.vmem [shape: f32[1,4], index: 11, kind: input, shape index: {}]
  %s12 = inlined_call_operand.vmem [shape: f32[1,4], index: 12, kind: input, shape index: {}]
  %s13 = inlined_call_operand.vmem [shape: f32[1,4], index: 13, kind: input, shape index: {}]
  %s14 = inlined_call_operand.vmem [shape: f32[1,4], index: 14, kind: input, shape index: {}]
  %s15 = inlined_call_operand.vmem [shape: bf16[4,128], index: 15, kind: input, shape index: {}]
  %s16 = inlined_call_operand.vmem [shape: bf16[4,128], index: 16, kind: input, shape index: {}]
  %s17 = inlined_call_operand.vmem [shape: bf16[4,128], index: 17, kind: input, shape index: {}]
  %s18 = inlined_call_operand.vmem [shape: f32[1,128], index: 18, kind: input, shape index: {}]
  %s19 = inlined_call_operand.vmem [shape: bf16[18,128], index: 19, kind: output, shape index: {}]
  %s20 = sld [smem:[#allocation0]]
  $region86: #{_lambda_.2} parent=0
    _
  %s22 = ssub.s32 1, %s20
  %s23 = scalar_select 0, %s22, %s20
  // Predicated region
  $region2: #{_lambda_.2} parent=0 // pred_check
    _
  $region3: #{_lambda_.2} parent=0 // pred_check_branch
    %25 = sbr.rel (0) target = $region5
  $region4: #{_lambda_.2} parent=0 // pred_region
    _
  $region5: #{_lambda_.2} parent=0 // pred_fallthru
    _
  // Predicated region
  $region6: #{_lambda_.2} parent=0 // pred_check
    _
  $region7: #{_lambda_.2} parent=0 // pred_check_branch
    %27 = sbr.rel (0) target = $region9
  $region8: #{_lambda_.2} parent=0 // pred_region
    _
  $region9: #{_lambda_.2} parent=0 // pred_fallthru
    _
  // Predicated region
  $region10: #{_lambda_.2} parent=0 // pred_check
    _
  $region11: #{_lambda_.2} parent=0 // pred_check_branch
    %29 = sbr.rel (0) target = $region13
  $region12: #{_lambda_.2} parent=0 // pred_region
    _
  $region13: #{_lambda_.2} parent=0 // pred_fallthru
    _
  // Predicated region
  $region14: #{_lambda_.2} parent=0 // pred_check
    _
  $region15: #{_lambda_.2} parent=0 // pred_check_branch
    %31 = sbr.rel (0) target = $region17
  $region16: #{_lambda_.2} parent=0 // pred_region
    _
  $region17: #{_lambda_.2} parent=0 // pred_fallthru
    _
  // Predicated region
  $region18: #{_lambda_.2} parent=0 // pred_check
    _
  $region19: #{_lambda_.2} parent=0 // pred_check_branch
    %33 = sbr.rel (0) target = $region21
  $region20: #{_lambda_.2} parent=0 // pred_region
    _
  $region21: #{_lambda_.2} parent=0 // pred_fallthru
    _
  // Predicated region
  $region22: #{_lambda_.2} parent=0 // pred_check
    _
  $region23: #{_lambda_.2} parent=0 // pred_check_branch
    %35 = sbr.rel (0) target = $region25
  $region24: #{_lambda_.2} parent=0 // pred_region
    _
  $region25: #{_lambda_.2} parent=0 // pred_fallthru
    _
  // Predicated region
  $region26: #{_lambda_.2} parent=0 // pred_check
    _
  $region27: #{_lambda_.2} parent=0 // pred_check_branch
    %37 = sbr.rel (0) target = $region29
  $region28: #{_lambda_.2} parent=0 // pred_region
    _
  $region29: #{_lambda_.2} parent=0 // pred_fallthru
    _
  // Predicated region
  $region30: #{_lambda_.2} parent=0 // pred_check
    _
  $region31: #{_lambda_.2} parent=0 // pred_check_branch
    %39 = sbr.rel (0) target = $region33
  $region32: #{_lambda_.2} parent=0 // pred_region
    _
  $region33: #{_lambda_.2} parent=0 // pred_fallthru
    _
  // Predicated region
  $region34: #{_lambda_.2} parent=0 // pred_check
    _
  $region35: #{_lambda_.2} parent=0 // pred_check_branch
    %41 = sbr.rel (0) target = $region37
  $region36: #{_lambda_.2} parent=0 // pred_region
    _
  $region37: #{_lambda_.2} parent=0 // pred_fallthru
    _
  // Predicated region
  $region38: #{_lambda_.2} parent=0 // pred_check
    _
  $region39: #{_lambda_.2} parent=0 // pred_check_branch
    %43 = sbr.rel (0) target = $region41
  $region40: #{_lambda_.2} parent=0 // pred_region
    _
  $region41: #{_lambda_.2} parent=0 // pred_fallthru
    _
  // Predicated region
  $region42: #{_lambda_.2} parent=0 // pred_check
    _
  $region43: #{_lambda_.2} parent=0 // pred_check_branch
    %45 = sbr.rel (0) target = $region45
  $region44: #{_lambda_.2} parent=0 // pred_region
    _
  $region45: #{_lambda_.2} parent=0 // pred_fallthru
    _
  // Predicated region
  $region46: #{_lambda_.2} parent=0 // pred_check
    _
  $region47: #{_lambda_.2} parent=0 // pred_check_branch
    %47 = sbr.rel (0) target = $region49
  $region48: #{_lambda_.2} parent=0 // pred_region
    _
  $region49: #{_lambda_.2} parent=0 // pred_fallthru
    _
  // Predicated region
  $region50: #{_lambda_.2} parent=0 // pred_check
    _
  $region51: #{_lambda_.2} parent=0 // pred_check_branch
    %49 = sbr.rel (0) target = $region53
  $region52: #{_lambda_.2} parent=0 // pred_region
    _
  $region53: #{_lambda_.2} parent=0 // pred_fallthru
    _
  // Predicated region
  $region54: #{_lambda_.2} parent=0 // pred_check
    _
  $region55: #{_lambda_.2} parent=0 // pred_check_branch
    %51 = sbr.rel (0) target = $region57
  $region56: #{_lambda_.2} parent=0 // pred_region
    _
  $region57: #{_lambda_.2} parent=0 // pred_fallthru
    _
  // Predicated region
  $region58: #{_lambda_.2} parent=0 // pred_check
    _
  $region59: #{_lambda_.2} parent=0 // pred_check_branch
    %53 = sbr.rel (0) target = $region61
  $region60: #{_lambda_.2} parent=0 // pred_region
    _
  $region61: #{_lambda_.2} parent=0 // pred_fallthru
    _
  // Predicated region
  $region62: #{_lambda_.2} parent=0 // pred_check
    _
  $region63: #{_lambda_.2} parent=0 // pred_check_branch
    %55 = sbr.rel (0) target = $region65
  $region64: #{_lambda_.2} parent=0 // pred_region
    _
  $region65: #{_lambda_.2} parent=0 // pred_fallthru
    _
  // Predicated region
  $region66: #{_lambda_.2} parent=0 // pred_check
    _
  $region67: #{_lambda_.2} parent=0 // pred_check_branch
    %57 = sbr.rel (0) target = $region69
  $region68: #{_lambda_.2} parent=0 // pred_region
    _
  $region69: #{_lambda_.2} parent=0 // pred_fallthru
    _
  // Predicated region
  $region70: #{_lambda_.2} parent=0 // pred_check
    _
  $region71: #{_lambda_.2} parent=0 // pred_check_branch
    %59 = sbr.rel (0) target = $region73
  $region72: #{_lambda_.2} parent=0 // pred_region
    _
  $region73: #{_lambda_.2} parent=0 // pred_fallthru
    _
  // Predicated region
  $region74: #{_lambda_.2} parent=0 // pred_check
    _
  $region75: #{_lambda_.2} parent=0 // pred_check_branch
    %61 = sbr.rel (0) target = $region77
  $region76: #{_lambda_.2} parent=0 // pred_region
    _
  $region77: #{_lambda_.2} parent=0 // pred_fallthru
    _
  %v63 = vld [vmem:[%s0] sm:$0xf]
  %v64 = vld [vmem:[%s0 + $0x4] sm:$0xf]
  %v65 = vld [vmem:[%s0 + $0x8] sm:$0x1]
  %v66 = vld [vmem:[%s3] sm:$0x3]
  %v67 = vld [vmem:[%s4] sm:$0x1]
  %v69 = vperm.slane %v67, 0
  %v74 = vunpack.c.l.b16 %v63
  %v75 = vunpack.c.l.b16 %v64
  %v76 = vunpack.c.l.b16 %v65
  %v77 = vpack.c.b16 %v75, %v74
  %v78 = vpack.c.b16 %v76, %v76
  %vm79 = vcmask 31744
  %v81 = vsel %vm79, %v77, 0
  %v84 = vsel %vm79, %v78, 0
  %vm86 = vcmask 1041408
  %v88 = vsel %vm86, %v66, 0
  %90 = vmatpush.bf16.msra.mxu0 0
  %91 = vmatpush.bf16.msra.mxu0 0
  %92 = vmatpush.bf16.msra.mxu0 0
  %93 = vmatpush.bf16.msra.mxu0 0
  %94 = vmatpush.bf16.msra.mxu0 0
  %95 = vmatpush.bf16.msra.mxu0 0
  %96 = vmatpush.bf16.msra.mxu0 0
  %97 = vmatpush.bf16.msra.mxu0 %v88
  %98 = vmatmul.bf16.gmra.mxu0 %v81
  %v99 = vpop.f32.mrf.mxu0
  %v100 = vadd.f32 %v69, %v99
  %v101 = vpop.f32.mrf.mxu0
  %v102 = vadd.f32 %v69, %v101
  %103 = vmatmul.bf16.gmra.mxu0 %v84
  %v104 = vpop.f32.mrf.mxu0
  %v105 = vadd.f32 %v69, %v104
  %v106 = vpop.f32.mrf.mxu0
  %107 = vdwg.mxu0
  %v108 = vmax.f32 %v100, 0.0
  %v109 = vmax.f32 %v102, 0.0
  %v110 = vmax.f32 %v105, 0.0
  %v111 = vld [vmem:[%s1] sm:$0xf]
  %v112 = vld [vmem:[%s1 + $0x4] sm:$0xf]
  %v113 = vld [vmem:[%s1 + $0x8] sm:$0x1]
  %v114 = vld [vmem:[%s5] sm:$0xf]
  %v115 = vld [vmem:[%s6] sm:$0x1]
  %v117 = vperm.slane %v115, 0
  %v122 = vunpack.c.l.b16 %v111
  %v123 = vunpack.c.l.b16 %v112
  %v124 = vunpack.c.l.b16 %v113
  %v125 = vpack.c.b16 %v123, %v122
  %v126 = vpack.c.b16 %v124, %v124
  %vm127 = vcmask 64512
  %v129 = vsel %vm127, %v125, 0
  %v132 = vsel %vm127, %v126, 0
  %vm134 = vcmask 1043456
  %v136 = vsel %vm134, %v114, 0
  %138 = vmatpush.bf16.msra.mxu0 0
  %139 = vmatpush.bf16.msra.mxu0 0
  %140 = vmatpush.bf16.msra.mxu0 0
  %141 = vmatpush.bf16.msra.mxu0 0
  %142 = vmatpush.bf16.msra.mxu0 0
  %143 = vmatpush.bf16.msra.mxu0 0
  %144 = vmatpush.bf16.msra.mxu0 0
  %145 = vmatpush.bf16.msra.mxu0 %v136
  %146 = vmatmul.bf16.gmra.mxu0 %v129
  %v147 = vpop.f32.mrf.mxu0
  %v148 = vadd.f32 %v117, %v147
  %v149 = vpop.f32.mrf.mxu0
  %v150 = vadd.f32 %v117, %v149
  %151 = vmatmul.bf16.gmra.mxu0 %v132
  %v152 = vpop.f32.mrf.mxu0
  %v153 = vadd.f32 %v117, %v152
  %v154 = vpop.f32.mrf.mxu0
  %155 = vdwg.mxu0
  %v156 = vmax.f32 %v148, 0.0
  %v157 = vmax.f32 %v150, 0.0
  %v158 = vmax.f32 %v153, 0.0
  %v159 = vld [vmem:[%s2] sm:$0xf]
  %v160 = vld [vmem:[%s2 + $0x4] sm:$0xf]
  %v161 = vld [vmem:[%s2 + $0x8] sm:$0x1]
  %v162 = vld [vmem:[%s7] sm:$0xf]
  %v163 = vld [vmem:[%s7 + $0x4] sm:$0xf]
  %v164 = vld [vmem:[%s8] sm:$0x1]
  %v166 = vperm.slane %v164, 0
  %v171 = vunpack.c.l.b16 %v159
  %v172 = vunpack.c.l.b16 %v160
  %v173 = vunpack.c.l.b16 %v161
  %v174 = vpack.c.b16 %v172, %v171
  %v175 = vpack.c.b16 %v173, %v173
  %v178 = vunpack.c.l.b16 %v162
  %v179 = vunpack.c.l.b16 %v163
  %v180 = vpack.c.b16 %v179, %v178
  %vm182 = vcmask 130048
  %v184 = vsel %vm182, %v174, 0
  %v187 = vsel %vm182, %v175, 0
  %189 = vmatpush.bf16.msra.mxu0 0
  %190 = vmatpush.bf16.msra.mxu0 0
  %191 = vmatpush.bf16.msra.mxu0 0
  %192 = vmatpush.bf16.msra.mxu0 0
  %193 = vmatpush.bf16.msra.mxu0 0
  %194 = vmatpush.bf16.msra.mxu0 0
  %195 = vmatpush.bf16.msra.mxu0 0
  %196 = vmatpush.bf16.msra.mxu0 %v180
  %197 = vmatmul.bf16.gmra.mxu0 %v184
  %v198 = vpop.f32.mrf.mxu0
  %v199 = vadd.f32 %v166, %v198
  %v200 = vpop.f32.mrf.mxu0
  %v201 = vadd.f32 %v166, %v200
  %202 = vmatmul.bf16.gmra.mxu0 %v187
  %v203 = vpop.f32.mrf.mxu0
  %v204 = vadd.f32 %v166, %v203
  %v205 = vpop.f32.mrf.mxu0
  %206 = vdwg.mxu0
  %v207 = vmax.f32 %v199, 0.0
  %v208 = vmax.f32 %v201, 0.0
  %v209 = vmax.f32 %v204, 0.0
  %v210 = vsel %vm79, %v108, 0.0
  %211 = vadd.xlane.f32.xlu0 %v210
  %v212 = vpop.xlane.xlu0 %211
  %v213 = vsel %vm79, %v109, 0.0
  %214 = vadd.xlane.f32.xlu0 %v213
  %v215 = vpop.xlane.xlu0 %214
  %vm216 = vcmask 25600
  %v217 = vsel %vm216, %v110, 0.0
  %218 = vadd.xlane.f32.xlu0 %v217
  %v219 = vpop.xlane.xlu0 %218
  %v220 = vsel %vm79, %v156, 0.0
  %221 = vadd.xlane.f32.xlu0 %v220
  %v222 = vpop.xlane.xlu0 %221
  %v223 = vsel %vm79, %v157, 0.0
  %224 = vadd.xlane.f32.xlu0 %v223
  %v225 = vpop.xlane.xlu0 %224
  %v226 = vsel %vm216, %v158, 0.0
  %227 = vadd.xlane.f32.xlu0 %v226
  %v228 = vpop.xlane.xlu0 %227
  %v229 = vadd.f32 %v212, %v222
  %v230 = vadd.f32 %v215, %v225
  %v231 = vadd.f32 %v219, %v228
  %v232 = vsel %vm79, %v207, 0.0
  %233 = vadd.xlane.f32.xlu0 %v232
  %v234 = vpop.xlane.xlu0 %233
  %v235 = vsel %vm79, %v208, 0.0
  %236 = vadd.xlane.f32.xlu0 %v235
  %v237 = vpop.xlane.xlu0 %236
  %v238 = vsel %vm216, %v209, 0.0
  %239 = vadd.xlane.f32.xlu0 %v238
  %v240 = vpop.xlane.xlu0 %239
  %v241 = vadd.f32 %v229, %v234
  %v242 = vadd.f32 %v230, %v237
  %v243 = vadd.f32 %v231, %v240
  %v244 = vmul.f32 %v108, %v108
  %v245 = vmul.f32 %v109, %v109
  %v246 = vmul.f32 %v110, %v110
  %v247 = vsel %vm79, %v244, 0.0
  %248 = vadd.xlane.f32.xlu0 %v247
  %v249 = vpop.xlane.xlu0 %248
  %v250 = vsel %vm79, %v245, 0.0
  %251 = vadd.xlane.f32.xlu0 %v250
  %v252 = vpop.xlane.xlu0 %251
  %v253 = vsel %vm216, %v246, 0.0
  %254 = vadd.xlane.f32.xlu0 %v253
  %v255 = vpop.xlane.xlu0 %254
  %v256 = vmul.f32 %v156, %v156
  %v257 = vmul.f32 %v157, %v157
  %v258 = vmul.f32 %v158, %v158
  %v259 = vsel %vm79, %v256, 0.0
  %260 = vadd.xlane.f32.xlu0 %v259
  %v261 = vpop.xlane.xlu0 %260
  %v262 = vsel %vm79, %v257, 0.0
  %263 = vadd.xlane.f32.xlu0 %v262
  %v264 = vpop.xlane.xlu0 %263
  %v265 = vsel %vm216, %v258, 0.0
  %266 = vadd.xlane.f32.xlu0 %v265
  %v267 = vpop.xlane.xlu0 %266
  %v268 = vadd.f32 %v249, %v261
  %v269 = vadd.f32 %v252, %v264
  %v270 = vadd.f32 %v255, %v267
  %v271 = vmul.f32 %v207, %v207
  %v272 = vmul.f32 %v208, %v208
  %v273 = vmul.f32 %v209, %v209
  %v274 = vsel %vm79, %v271, 0.0
  %275 = vadd.xlane.f32.xlu0 %v274
  %v276 = vpop.xlane.xlu0 %275
  %v277 = vsel %vm79, %v272, 0.0
  %278 = vadd.xlane.f32.xlu0 %v277
  %v279 = vpop.xlane.xlu0 %278
  %v280 = vsel %vm216, %v273, 0.0
  %281 = vadd.xlane.f32.xlu0 %v280
  %v282 = vpop.xlane.xlu0 %281
  %v283 = vadd.f32 %v268, %v276
  %v284 = vadd.f32 %v269, %v279
  %v285 = vadd.f32 %v270, %v282
  %v286 = vmul.f32 %v241, 0.083333336
  %v287 = vmul.f32 %v242, 0.083333336
  %v288 = vmul.f32 %v243, 0.083333336
  %v289 = vmul.f32 %v283, 0.083333336
  %v290 = vmul.f32 %v284, 0.083333336
  %v291 = vmul.f32 %v285, 0.083333336
  %v292 = vmul.f32 %v286, %v286
  %v293 = vmul.f32 %v287, %v287
  %v294 = vmul.f32 %v288, %v288
  %v295 = vsub.f32 %v289, %v292
  %v296 = vsub.f32 %v290, %v293
  %v297 = vsub.f32 %v291, %v294
  %v298 = vadd.f32 %v295, 1e-05
  %v299 = vadd.f32 %v296, 1e-05
  %v300 = vadd.f32 %v297, 1e-05
  %v301 = vrsqrt.pop %v298
  %v302 = vmul.f32 %v301, %v298
  %v303 = vmul.f32 %v302, %v301
  %v304 = vmul.f32 0.5, %v303
  %v305 = vsub.f32 1.5, %v304
  %v306 = vmul.f32 %v301, %v305
  %vm307 = vweird.f32 %v298
  %vm308 = vweird.f32 %v301
  %vm309 = vmor %vm307, %vm308
  %v310 = vsel %vm309, %v301, %v306
  %v311 = vrsqrt.pop %v299
  %v312 = vmul.f32 %v311, %v299
  %v313 = vmul.f32 %v312, %v311
  %v314 = vmul.f32 0.5, %v313
  %v315 = vsub.f32 1.5, %v314
  %v316 = vmul.f32 %v311, %v315
  %vm317 = vweird.f32 %v299
  %vm318 = vweird.f32 %v311
  %vm319 = vmor %vm317, %vm318
  %v320 = vsel %vm319, %v311, %v316
  %v321 = vrsqrt.pop %v300
  %v322 = vmul.f32 %v321, %v300
  %v323 = vmul.f32 %v322, %v321
  %v324 = vmul.f32 0.5, %v323
  %v325 = vsub.f32 1.5, %v324
  %v326 = vmul.f32 %v321, %v325
  %vm327 = vweird.f32 %v300
  %vm328 = vweird.f32 %v321
  %vm329 = vmor %vm327, %vm328
  %v330 = vsel %vm329, %v321, %v326
  %v331 = vsub.f32 %v108, %v286
  %v332 = vsub.f32 %v109, %v287
  %v333 = vsub.f32 %v110, %v288
  %v334 = vmul.f32 %v331, %v310
  %v335 = vmul.f32 %v332, %v320
  %v336 = vmul.f32 %v333, %v330
  %v337 = vld [vmem:[%s9] sm:$0x1]
  %v339 = vperm.slane %v337, 0
  %v341 = vmul.f32 %v334, %v339
  %v342 = vmul.f32 %v335, %v339
  %v343 = vmul.f32 %v336, %v339
  %v344 = vld [vmem:[%s12] sm:$0x1]
  %v346 = vperm.slane %v344, 0
  %v348 = vadd.f32 %v341, %v346
  %v349 = vadd.f32 %v342, %v346
  %v350 = vadd.f32 %v343, %v346
  %v351 = vpack.c.bf16 %v349, %v348
  %v352 = vpack.c.bf16 %v350, %v350
  %v353 = vld [vmem:[%s15] sm:$0x3]
  %v354 = vsub.f32 %v156, %v286
  %v355 = vsub.f32 %v157, %v287
  %v356 = vsub.f32 %v158, %v288
  %v357 = vmul.f32 %v354, %v310
  %v358 = vmul.f32 %v355, %v320
  %v359 = vmul.f32 %v356, %v330
  %v360 = vld [vmem:[%s10] sm:$0x1]
  %v362 = vperm.slane %v360, 0
  %v364 = vmul.f32 %v357, %v362
  %v365 = vmul.f32 %v358, %v362
  %v366 = vmul.f32 %v359, %v362
  %v367 = vld [vmem:[%s13] sm:$0x1]
  %v369 = vperm.slane %v367, 0
  %v371 = vadd.f32 %v364, %v369
  %v372 = vadd.f32 %v365, %v369
  %v373 = vadd.f32 %v366, %v369
  %v374 = vpack.c.bf16 %v372, %v371
  %v375 = vpack.c.bf16 %v373, %v373
  %v376 = vld [vmem:[%s16] sm:$0x3]
  %v378 = vsel %vm79, %v374, 0
  %v381 = vsel %vm79, %v375, 0
  %v384 = vsel %vm86, %v376, 0
  %386 = vmatpush.bf16.msra.mxu0 0
  %387 = vmatpush.bf16.msra.mxu0 0
  %388 = vmatpush.bf16.msra.mxu0 0
  %389 = vmatpush.bf16.msra.mxu0 0
  %390 = vmatpush.bf16.msra.mxu0 0
  %391 = vmatpush.bf16.msra.mxu0 0
  %392 = vmatpush.bf16.msra.mxu0 0
  %393 = vmatpush.bf16.msra.mxu0 %v384
  %394 = vmatmul.bf16.gmra.mxu0 %v378
  %v395 = vpop.f32.mrf.mxu0
  %v396 = vadd.f32 0.0, %v395
  %v397 = vpop.f32.mrf.mxu0
  %v398 = vadd.f32 0.0, %v397
  %399 = vmatmul.bf16.gmra.mxu0 %v381
  %v400 = vpop.f32.mrf.mxu0
  %v401 = vadd.f32 0.0, %v400
  %v402 = vpop.f32.mrf.mxu0
  %403 = vdwg.mxu0
  %v405 = vsel %vm79, %v351, 0
  %v408 = vsel %vm79, %v352, 0
  %v411 = vsel %vm86, %v353, 0
  %413 = vmatpush.bf16.msra.mxu0 0
  %414 = vmatpush.bf16.msra.mxu0 0
  %415 = vmatpush.bf16.msra.mxu0 0
  %416 = vmatpush.bf16.msra.mxu0 0
  %417 = vmatpush.bf16.msra.mxu0 0
  %418 = vmatpush.bf16.msra.mxu0 0
  %419 = vmatpush.bf16.msra.mxu0 0
  %420 = vmatpush.bf16.msra.mxu0 %v411
  %421 = vmatmul.bf16.gmra.mxu0 %v405
  %v422 = vpop.f32.mrf.mxu0
  %v423 = vadd.f32 %v396, %v422
  %v424 = vpop.f32.mrf.mxu0
  %v425 = vadd.f32 %v398, %v424
  %426 = vmatmul.bf16.gmra.mxu0 %v408
  %v427 = vpop.f32.mrf.mxu0
  %v428 = vadd.f32 %v401, %v427
  %v429 = vpop.f32.mrf.mxu0
  %430 = vdwg.mxu0
  %v431 = vsub.f32 %v207, %v286
  %v432 = vsub.f32 %v208, %v287
  %v433 = vsub.f32 %v209, %v288
  %v434 = vmul.f32 %v431, %v310
  %v435 = vmul.f32 %v432, %v320
  %v436 = vmul.f32 %v433, %v330
  %v437 = vld [vmem:[%s11] sm:$0x1]
  %v439 = vperm.slane %v437, 0
  %v441 = vmul.f32 %v434, %v439
  %v442 = vmul.f32 %v435, %v439
  %v443 = vmul.f32 %v436, %v439
  %v444 = vld [vmem:[%s14] sm:$0x1]
  %v446 = vperm.slane %v444, 0
  %v448 = vadd.f32 %v441, %v446
  %v449 = vadd.f32 %v442, %v446
  %v450 = vadd.f32 %v443, %v446
  %v451 = vpack.c.bf16 %v449, %v448
  %v452 = vpack.c.bf16 %v450, %v450
  %v453 = vld [vmem:[%s17] sm:$0x3]
  %v455 = vsel %vm79, %v451, 0
  %v458 = vsel %vm79, %v452, 0
  %v461 = vsel %vm86, %v453, 0
  %463 = vmatpush.bf16.msra.mxu0 0
  %464 = vmatpush.bf16.msra.mxu0 0
  %465 = vmatpush.bf16.msra.mxu0 0
  %466 = vmatpush.bf16.msra.mxu0 0
  %467 = vmatpush.bf16.msra.mxu0 0
  %468 = vmatpush.bf16.msra.mxu0 0
  %469 = vmatpush.bf16.msra.mxu0 0
  %470 = vmatpush.bf16.msra.mxu0 %v461
  %471 = vmatmul.bf16.gmra.mxu0 %v455
  %v472 = vpop.f32.mrf.mxu0
  %v473 = vadd.f32 0.0, %v472
  %v474 = vpop.f32.mrf.mxu0
  %v475 = vadd.f32 0.0, %v474
  %476 = vmatmul.bf16.gmra.mxu0 %v458
  %v477 = vpop.f32.mrf.mxu0
  %v478 = vadd.f32 0.0, %v477
  %v479 = vpop.f32.mrf.mxu0
  %480 = vdwg.mxu0
  %v481 = vadd.f32 %v423, %v473
  %v482 = vadd.f32 %v425, %v475
  %v483 = vadd.f32 %v428, %v478
  %v484 = vld [vmem:[%s18] sm:$0x1]
  %v486 = vperm.slane %v484, 0
  %v488 = vadd.f32 %v481, %v486
  %v489 = vadd.f32 %v482, %v486
  %v490 = vadd.f32 %v483, %v486
  %v491 = vpack.c.bf16 %v488, %v488
  %v492 = vpack.c.bf16 %v489, %v489
  %v493 = vpack.c.bf16 %v490, %v490
  %494 = vst [vmem:[%s19] sm:$0xf] %v491
  %495 = vst [vmem:[%s19 + $0x4] sm:$0xf] %v492
  %496 = vst [vmem:[%s19 + $0x8] sm:$0x1] %v493
  // Predicated region
  $region78: #{_lambda_.2} parent=0 // pred_check
    _
  $region79: #{_lambda_.2} parent=0 // pred_check_branch
    %498 = sbr.rel (0) target = $region81
  $region80: #{_lambda_.2} parent=0 // pred_region
    _
  $region81: #{_lambda_.2} parent=0 // pred_fallthru
    _
  // Predicated region
  $region82: #{_lambda_.2} parent=0 // pred_check
    _
  $region83: #{_lambda_.2} parent=0 // pred_check_branch
    %500 = sbr.rel (0) target = $region85
  $region84: #{_lambda_.2} parent=0 // pred_region
    _
  $region85: #{_lambda_.2} parent=0 // pred_fallthru
    _

// kernel: _lambda_.3
$region0: #{_lambda_.3}
  #allocation0 [shape = 'u32[]', space=smem, size = 0x4, offset = 0x4, fixed_abs, tag = 'smem constant byte address 0x4 - core index']
  #allocation1 [shape = 'u32[72,128]{1,0:T(1,128)}', space=vmem, size = 0x9000, scoped, tag = 'internal scratch']
  %s0 = inlined_call_operand.vmem [shape: bf16[18,128], index: 0, kind: input, shape index: {}]
  %s1 = inlined_call_operand.vmem [shape: bf16[2,128,128], index: 1, kind: input, shape index: {}]
  %s2 = inlined_call_operand.vmem [shape: f32[2,128], index: 2, kind: input, shape index: {}]
  %s3 = inlined_call_operand.vmem [shape: f32[2,128], index: 3, kind: input, shape index: {}]
  %s4 = inlined_call_operand.vmem [shape: f32[2,128], index: 4, kind: input, shape index: {}]
  %s5 = inlined_call_operand.vmem [shape: f32[2,1], index: 5, kind: input, shape index: {}]
  %s6 = inlined_call_operand.hbm [shape: bf16[2,128,128], index: 6, kind: input, shape index: {}]
  %s7 = inlined_call_operand.vmem [shape: f32[2,128], index: 7, kind: input, shape index: {}]
  %s8 = inlined_call_operand.vmem [shape: f32[2,128], index: 8, kind: input, shape index: {}]
  %s9 = inlined_call_operand.vmem [shape: f32[2,128], index: 9, kind: input, shape index: {}]
  %s10 = inlined_call_operand.vmem [shape: f32[2,1], index: 10, kind: input, shape index: {}]
  %s11 = inlined_call_operand.vmem [shape: bf16[128,128], index: 11, kind: input, shape index: {}]
  %s12 = inlined_call_operand.vmem [shape: f32[1,128], index: 12, kind: input, shape index: {}]
  %s13 = inlined_call_operand.hbm [shape: bf16[128,5], index: 13, kind: input, shape index: {}]
  %s14 = inlined_call_operand.vmem [shape: f32[1,5], index: 14, kind: input, shape index: {}]
  %s15 = inlined_call_operand.hbm [shape: f32[2,5], index: 15, kind: output, shape index: {}]
  %s16 = sld [smem:[#allocation0]]
  $region78: #{_lambda_.3} parent=0
    _
  %s18 = ssub.s32 1, %s16
  %s19 = scalar_select 0, %s18, %s16
  $region1: #{_lambda_.3} parent=0
    #allocation2 [shape = 'u8[65536]{0}', space=vmem, size = 0x10000, scoped, tag = 'input window, operand 6, single buffered']
    #allocation3 [shape = 's32[1]{0}', space=sflag, size = 0x4, scoped, tag = 'scoped memory for _lambda_.3']
    #allocation4 [shape = 's32[1]{0}', space=sflag, size = 0x4, scoped, tag = 'scoped memory for _lambda_.3']
    #allocation5 [shape = 'u8[32768]{0}', space=vmem, size = 0x8000, scoped, tag = 'input window, operand 13, single buffered']
    #allocation6 [shape = 's32[1]{0}', space=sflag, size = 0x4, scoped, tag = 'scoped memory for _lambda_.3']
    #allocation7 [shape = 'u8[1024]{0}', space=vmem, size = 0x400, scoped, tag = 'output window, operand 0, single buffered']
    %20 = vsyncpa [#allocation3], 0
    %21 = vsyncpa [#allocation6], 0
    %22 = vsyncpa [#allocation4], 0
    // Predicated region
    $region2: #{_lambda_.3} parent=1 // pred_check
      _
    $region3: #{_lambda_.3} parent=1 // pred_check_branch
      %24 = sbr.rel (0) target = $region5
    $region4: #{_lambda_.3} parent=1 // pred_region
      _
    $region5: #{_lambda_.3} parent=1 // pred_fallthru
      _
    // Predicated region
    $region6: #{_lambda_.3} parent=1 // pred_check
      _
    $region7: #{_lambda_.3} parent=1 // pred_check_branch
      %26 = sbr.rel (0) target = $region9
    $region8: #{_lambda_.3} parent=1 // pred_region
      _
    $region9: #{_lambda_.3} parent=1 // pred_fallthru
      _
    // Predicated region
    $region10: #{_lambda_.3} parent=1 // pred_check
      _
    $region11: #{_lambda_.3} parent=1 // pred_check_branch
      %28 = sbr.rel (0) target = $region13
    $region12: #{_lambda_.3} parent=1 // pred_region
      _
    $region13: #{_lambda_.3} parent=1 // pred_fallthru
      _
    // Predicated region
    $region14: #{_lambda_.3} parent=1 // pred_check
      _
    $region15: #{_lambda_.3} parent=1 // pred_check_branch
      %30 = sbr.rel (0) target = $region17
    $region16: #{_lambda_.3} parent=1 // pred_region
      _
    $region17: #{_lambda_.3} parent=1 // pred_fallthru
      _
    // Predicated region
    $region18: #{_lambda_.3} parent=1 // pred_check
      _
    $region19: #{_lambda_.3} parent=1 // pred_check_branch
      %32 = sbr.rel (0) target = $region21
    $region20: #{_lambda_.3} parent=1 // pred_region
      _
    $region21: #{_lambda_.3} parent=1 // pred_fallthru
      _
    // Predicated region
    $region22: #{_lambda_.3} parent=1 // pred_check
      _
    $region23: #{_lambda_.3} parent=1 // pred_check_branch
      %34 = sbr.rel (0) target = $region25
    $region24: #{_lambda_.3} parent=1 // pred_region
      _
    $region25: #{_lambda_.3} parent=1 // pred_fallthru
      _
    // Predicated region
    $region26: #{_lambda_.3} parent=1 // pred_check
      _
    $region27: #{_lambda_.3} parent=1 // pred_check_branch
      %36 = sbr.rel (0) target = $region29
    $region28: #{_lambda_.3} parent=1 // pred_region
      %38 = vsyncadd [#allocation3], 0
      %s39 = sshll.u32 %s6, 4
      %s40 = int_to_ptr.hbm [resolvable:$true] %s39
      %s41 = sshll.u32 [#allocation2], 4
      %s42 = int_to_ptr.vmem [resolvable:$true] %s41
      %47 = dma.hbm_to_vmem [thread:$0]  %s40, 2048, %s42, [#allocation3], 64, 64, 4
    $region29: #{_lambda_.3} parent=1 // pred_fallthru
      _
    // Predicated region
    $region30: #{_lambda_.3} parent=1 // pred_check
      _
    $region31: #{_lambda_.3} parent=1 // pred_check_branch
      %49 = sbr.rel (0) target = $region33
    $region32: #{_lambda_.3} parent=1 // pred_region
      _
    $region33: #{_lambda_.3} parent=1 // pred_fallthru
      _
    // Predicated region
    $region34: #{_lambda_.3} parent=1 // pred_check
      _
    $region35: #{_lambda_.3} parent=1 // pred_check_branch
      %51 = sbr.rel (0) target = $region37
    $region36: #{_lambda_.3} parent=1 // pred_region
      _
    $region37: #{_lambda_.3} parent=1 // pred_fallthru
      _
    // Predicated region
    $region38: #{_lambda_.3} parent=1 // pred_check
      _
    $region39: #{_lambda_.3} parent=1 // pred_check_branch
      %53 = sbr.rel (0) target = $region41
    $region40: #{_lambda_.3} parent=1 // pred_region
      _
    $region41: #{_lambda_.3} parent=1 // pred_fallthru
      _
    // Predicated region
    $region42: #{_lambda_.3} parent=1 // pred_check
      _
    $region43: #{_lambda_.3} parent=1 // pred_check_branch
      %55 = sbr.rel (0) target = $region45
    $region44: #{_lambda_.3} parent=1 // pred_region
      _
    $region45: #{_lambda_.3} parent=1 // pred_fallthru
      _
    // Predicated region
    $region46: #{_lambda_.3} parent=1 // pred_check
      _
    $region47: #{_lambda_.3} parent=1 // pred_check_branch
      %57 = sbr.rel (0) target = $region49
    $region48: #{_lambda_.3} parent=1 // pred_region
      _
    $region49: #{_lambda_.3} parent=1 // pred_fallthru
      _
    // Predicated region
    $region50: #{_lambda_.3} parent=1 // pred_check
      _
    $region51: #{_lambda_.3} parent=1 // pred_check_branch
      %59 = sbr.rel (0) target = $region53
    $region52: #{_lambda_.3} parent=1 // pred_region
      _
    $region53: #{_lambda_.3} parent=1 // pred_fallthru
      _
    // Predicated region
    $region54: #{_lambda_.3} parent=1 // pred_check
      _
    $region55: #{_lambda_.3} parent=1 // pred_check_branch
      %61 = sbr.rel (0) target = $region57
    $region56: #{_lambda_.3} parent=1 // pred_region
      %63 = vsyncadd [#allocation6], 0
      %s64 = sshll.u32 %s13, 4
      %s65 = int_to_ptr.hbm [resolvable:$true] %s64
      %s66 = sshll.u32 [#allocation5], 4
      %s67 = int_to_ptr.vmem [resolvable:$true] %s66
      %72 = dma.hbm_to_vmem [thread:$0]  %s65, 1024, %s67, [#allocation6], 64, 64, 4
    $region57: #{_lambda_.3} parent=1 // pred_fallthru
      _
    // Predicated region
    $region58: #{_lambda_.3} parent=1 // pred_check
      _
    $region59: #{_lambda_.3} parent=1 // pred_check_branch
      %74 = sbr.rel (0) target = $region61
    $region60: #{_lambda_.3} parent=1 // pred_region
      _
    $region61: #{_lambda_.3} parent=1 // pred_fallthru
      _
    // Predicated region
    $region62: #{_lambda_.3} parent=1 // pred_check
      _
    $region63: #{_lambda_.3} parent=1 // pred_check_branch
      %76 = sbr.rel (0) target = $region65
    $region64: #{_lambda_.3} parent=1 // pred_region
      %78 = dma.done [#allocation3], 2048
    $region65: #{_lambda_.3} parent=1 // pred_fallthru
      _
    // Predicated region
    $region66: #{_lambda_.3} parent=1 // pred_check
      _
    $region67: #{_lambda_.3} parent=1 // pred_check_branch
      %80 = sbr.rel (0) target = $region69
    $region68: #{_lambda_.3} parent=1 // pred_region
      %82 = dma.done [#allocation6], 1024
    $region69: #{_lambda_.3} parent=1 // pred_fallthru
      _
    %v83 = vld [vmem:[%s0] sm:$0xf]
    %v84 = vld [vmem:[%s0 + $0x4] sm:$0xf]
    %v85 = vld [vmem:[%s0 + $0x8] sm:$0x1]
    %v86 = vld [vmem:[%s1] sm:$0xf]
    %v87 = vld [vmem:[%s1 + $0x4] sm:$0xf]
    %v88 = vld [vmem:[%s1 + $0x8] sm:$0xf]
    %v89 = vld [vmem:[%s1 + $0xc] sm:$0xf]
    %v90 = vld [vmem:[%s1 + $0x10] sm:$0xf]
    %v91 = vld [vmem:[%s1 + $0x14] sm:$0xf]
    %v92 = vld [vmem:[%s1 + $0x18] sm:$0xf]
    %v93 = vld [vmem:[%s1 + $0x1c] sm:$0xf]
    %v94 = vld [vmem:[%s1 + $0x20] sm:$0xf]
    %v95 = vld [vmem:[%s1 + $0x24] sm:$0xf]
    %v96 = vld [vmem:[%s1 + $0x28] sm:$0xf]
    %v97 = vld [vmem:[%s1 + $0x2c] sm:$0xf]
    %v98 = vld [vmem:[%s1 + $0x30] sm:$0xf]
    %v99 = vld [vmem:[%s1 + $0x34] sm:$0xf]
    %v100 = vld [vmem:[%s1 + $0x38] sm:$0xf]
    %v101 = vld [vmem:[%s1 + $0x3c] sm:$0xf]
    %v102 = vld [vmem:[%s2] sm:$0x1]
    %v103 = vperm.slane %v102, 0
    %v107 = vunpack.c.l.b16 %v83
    %v108 = vunpack.c.l.b16 %v84
    %v109 = vunpack.c.l.b16 %v85
    %v110 = vpack.c.b16 %v108, %v107
    %v111 = vpack.c.b16 %v109, %v109
    %v130 = vunpack.c.l.b16 %v86
    %v131 = vunpack.c.l.b16 %v87
    %v132 = vunpack.c.l.b16 %v88
    %v133 = vunpack.c.l.b16 %v89
    %v134 = vunpack.c.l.b16 %v90
    %v135 = vunpack.c.l.b16 %v91
    %v136 = vunpack.c.l.b16 %v92
    %v137 = vunpack.c.l.b16 %v93
    %v138 = vunpack.c.l.b16 %v94
    %v139 = vunpack.c.l.b16 %v95
    %v140 = vunpack.c.l.b16 %v96
    %v141 = vunpack.c.l.b16 %v97
    %v142 = vunpack.c.l.b16 %v98
    %v143 = vunpack.c.l.b16 %v99
    %v144 = vunpack.c.l.b16 %v100
    %v145 = vunpack.c.l.b16 %v101
    %v146 = vpack.c.b16 %v131, %v130
    %v147 = vpack.c.b16 %v133, %v132
    %v148 = vpack.c.b16 %v135, %v134
    %v149 = vpack.c.b16 %v137, %v136
    %v150 = vpack.c.b16 %v139, %v138
    %v151 = vpack.c.b16 %v141, %v140
    %v152 = vpack.c.b16 %v143, %v142
    %v153 = vpack.c.b16 %v145, %v144
    %162 = vmatpush.bf16.msra.mxu0 %v153
    %163 = vmatpush.bf16.msra.mxu0 %v152
    %164 = vmatpush.bf16.msra.mxu0 %v151
    %165 = vmatpush.bf16.msra.mxu0 %v150
    %166 = vmatpush.bf16.msra.mxu0 %v149
    %167 = vmatpush.bf16.msra.mxu0 %v148
    %168 = vmatpush.bf16.msra.mxu0 %v147
    %169 = vmatpush.bf16.msra.mxu0 %v146
    %170 = vmatmul.bf16.gmra.mxu0 %v110
    %v171 = vpop.f32.mrf.mxu0
    %v172 = vadd.f32 %v103, %v171
    %v173 = vpop.f32.mrf.mxu0
    %v174 = vadd.f32 %v103, %v173
    %175 = vmatmul.bf16.gmra.mxu0 %v111
    %v176 = vpop.f32.mrf.mxu0
    %v177 = vadd.f32 %v103, %v176
    %v178 = vpop.f32.mrf.mxu0
    %179 = vdwg.mxu0
    %v180 = vld [vmem:[%s3] sm:$0x1]
    %v181 = vld [vmem:[%s4] sm:$0x1]
    %v182 = vadd.f32 %v172, %v174
    %vm183 = vcmask 1041408
    %v184 = vsel %vm183, %v177, 0.0
    %v185 = vadd.f32 %v182, %v184
    %v186 = vrot.slane %v185, 4
    %v187 = vadd.f32 %v185, %v186
    %v188 = vrot.slane %v187, 2
    %v189 = vadd.f32 %v187, %v188
    %v190 = vrot.slane %v189, 1
    %v191 = vadd.f32 %v189, %v190
    %v192 = vmul.f32 %v172, %v172
    %v193 = vmul.f32 %v174, %v174
    %v194 = vmul.f32 %v177, %v177
    %v195 = vadd.f32 %v192, %v193
    %v196 = vsel %vm183, %v194, 0.0
    %v197 = vadd.f32 %v195, %v196
    %v198 = vrot.slane %v197, 4
    %v199 = vadd.f32 %v197, %v198
    %v200 = vrot.slane %v199, 2
    %v201 = vadd.f32 %v199, %v200
    %v202 = vrot.slane %v201, 1
    %v203 = vadd.f32 %v201, %v202
    %v204 = vmul.f32 %v191, 0.055555556
    %v205 = vmul.f32 %v203, 0.055555556
    %v206 = vmul.f32 %v204, %v204
    %v207 = vsub.f32 %v205, %v206
    %v208 = vadd.f32 %v207, 1e-05
    %v209 = vrsqrt.pop %v208
    %v210 = vmul.f32 %v209, %v208
    %v211 = vmul.f32 %v210, %v209
    %v212 = vmul.f32 0.5, %v211
    %v213 = vsub.f32 1.5, %v212
    %v214 = vmul.f32 %v209, %v213
    %vm215 = vweird.f32 %v208
    %vm216 = vweird.f32 %v209
    %vm217 = vmor %vm215, %vm216
    %v218 = vsel %vm217, %v209, %v214
    %v219 = vmul.f32 %v180, %v218
    %v220 = vmul.f32 %v204, %v219
    %v221 = vsub.f32 %v181, %v220
    %v222 = vperm.slane %v219, 0
    %v223 = vmul.f32 %v172, %v222
    %v224 = vmul.f32 %v174, %v222
    %v225 = vmul.f32 %v177, %v222
    %v226 = vperm.slane %v221, 0
    %v227 = vadd.f32 %v223, %v226
    %v228 = vadd.f32 %v224, %v226
    %v229 = vadd.f32 %v225, %v226
    %v230 = vld [vmem:[%s5] sm:$0x1]
    %vm231 = vcmp.gt.f32.partialorder %v227, 0.0
    %vm232 = vcmp.gt.f32.partialorder %v228, 0.0
    %vm233 = vcmp.gt.f32.partialorder %v229, 0.0
    %s235 = vtos %v230
    %v236 = vstv %s235
    %v238 = vmul.f32 %v236, %v227
    %v239 = vmul.f32 %v236, %v228
    %v240 = vmul.f32 %v236, %v229
    %v241 = vsel %vm231, %v227, %v238
    %v242 = vsel %vm232, %v228, %v239
    %v243 = vsel %vm233, %v229, %v240
    %v244 = vpack.c.bf16 %v242, %v241
    %v245 = vpack.c.bf16 %v243, %v243
    %v246 = vld [vmem:[#allocation2] sm:$0xf]
    %v247 = vld [vmem:[#allocation2 + $0x4] sm:$0xf]
    %v248 = vld [vmem:[#allocation2 + $0x8] sm:$0xf]
    %v249 = vld [vmem:[#allocation2 + $0xc] sm:$0xf]
    %v250 = vld [vmem:[#allocation2 + $0x10] sm:$0xf]
    %v251 = vld [vmem:[#allocation2 + $0x14] sm:$0xf]
    %v252 = vld [vmem:[#allocation2 + $0x18] sm:$0xf]
    %v253 = vld [vmem:[#allocation2 + $0x1c] sm:$0xf]
    %v254 = vld [vmem:[#allocation2 + $0x20] sm:$0xf]
    %v255 = vld [vmem:[#allocation2 + $0x24] sm:$0xf]
    %v256 = vld [vmem:[#allocation2 + $0x28] sm:$0xf]
    %v257 = vld [vmem:[#allocation2 + $0x2c] sm:$0xf]
    %v258 = vld [vmem:[#allocation2 + $0x30] sm:$0xf]
    %v259 = vld [vmem:[#allocation2 + $0x34] sm:$0xf]
    %v260 = vld [vmem:[#allocation2 + $0x38] sm:$0xf]
    %v261 = vld [vmem:[#allocation2 + $0x3c] sm:$0xf]
    %v262 = vld [vmem:[%s7] sm:$0x1]
    %v263 = vperm.slane %v262, 0
    %v280 = vunpack.c.l.b16 %v246
    %v281 = vunpack.c.l.b16 %v247
    %v282 = vunpack.c.l.b16 %v248
    %v283 = vunpack.c.l.b16 %v249
    %v284 = vunpack.c.l.b16 %v250
    %v285 = vunpack.c.l.b16 %v251
    %v286 = vunpack.c.l.b16 %v252
    %v287 = vunpack.c.l.b16 %v253
    %v288 = vunpack.c.l.b16 %v254
    %v289 = vunpack.c.l.b16 %v255
    %v290 = vunpack.c.l.b16 %v256
    %v291 = vunpack.c.l.b16 %v257
    %v292 = vunpack.c.l.b16 %v258
    %v293 = vunpack.c.l.b16 %v259
    %v294 = vunpack.c.l.b16 %v260
    %v295 = vunpack.c.l.b16 %v261
    %v296 = vpack.c.b16 %v281, %v280
    %v297 = vpack.c.b16 %v283, %v282
    %v298 = vpack.c.b16 %v285, %v284
    %v299 = vpack.c.b16 %v287, %v286
    %v300 = vpack.c.b16 %v289, %v288
    %v301 = vpack.c.b16 %v291, %v290
    %v302 = vpack.c.b16 %v293, %v292
    %v303 = vpack.c.b16 %v295, %v294
    %312 = vmatpush.bf16.msra.mxu0 %v303
    %313 = vmatpush.bf16.msra.mxu0 %v302
    %314 = vmatpush.bf16.msra.mxu0 %v301
    %315 = vmatpush.bf16.msra.mxu0 %v300
    %316 = vmatpush.bf16.msra.mxu0 %v299
    %317 = vmatpush.bf16.msra.mxu0 %v298
    %318 = vmatpush.bf16.msra.mxu0 %v297
    %319 = vmatpush.bf16.msra.mxu0 %v296
    %320 = vmatmul.bf16.gmra.mxu0 %v244
    %v321 = vpop.f32.mrf.mxu0
    %v322 = vadd.f32 %v263, %v321
    %v323 = vpop.f32.mrf.mxu0
    %v324 = vadd.f32 %v263, %v323
    %325 = vmatmul.bf16.gmra.mxu0 %v245
    %v326 = vpop.f32.mrf.mxu0
    %v327 = vadd.f32 %v263, %v326
    %v328 = vpop.f32.mrf.mxu0
    %329 = vdwg.mxu0
    %v330 = vld [vmem:[%s8] sm:$0x1]
    %v331 = vld [vmem:[%s9] sm:$0x1]
    %v332 = vadd.f32 %v322, %v324
    %v333 = vsel %vm183, %v327, 0.0
    %v334 = vadd.f32 %v332, %v333
    %v335 = vrot.slane %v334, 4
    %v336 = vadd.f32 %v334, %v335
    %v337 = vrot.slane %v336, 2
    %v338 = vadd.f32 %v336, %v337
    %v339 = vrot.slane %v338, 1
    %v340 = vadd.f32 %v338, %v339
    %v341 = vmul.f32 %v322, %v322
    %v342 = vmul.f32 %v324, %v324
    %v343 = vmul.f32 %v327, %v327
    %v344 = vadd.f32 %v341, %v342
    %v345 = vsel %vm183, %v343, 0.0
    %v346 = vadd.f32 %v344, %v345
    %v347 = vrot.slane %v346, 4
    %v348 = vadd.f32 %v346, %v347
    %v349 = vrot.slane %v348, 2
    %v350 = vadd.f32 %v348, %v349
    %v351 = vrot.slane %v350, 1
    %v352 = vadd.f32 %v350, %v351
    %v353 = vmul.f32 %v340, 0.055555556
    %v354 = vmul.f32 %v352, 0.055555556
    %v355 = vmul.f32 %v353, %v353
    %v356 = vsub.f32 %v354, %v355
    %v357 = vadd.f32 %v356, 1e-05
    %v358 = vrsqrt.pop %v357
    %v359 = vmul.f32 %v358, %v357
    %v360 = vmul.f32 %v359, %v358
    %v361 = vmul.f32 0.5, %v360
    %v362 = vsub.f32 1.5, %v361
    %v363 = vmul.f32 %v358, %v362
    %vm364 = vweird.f32 %v357
    %vm365 = vweird.f32 %v358
    %vm366 = vmor %vm364, %vm365
    %v367 = vsel %vm366, %v358, %v363
    %v368 = vmul.f32 %v330, %v367
    %v369 = vmul.f32 %v353, %v368
    %v370 = vsub.f32 %v331, %v369
    %v371 = vperm.slane %v368, 0
    %v372 = vmul.f32 %v322, %v371
    %v373 = vmul.f32 %v324, %v371
    %v374 = vmul.f32 %v327, %v371
    %v375 = vperm.slane %v370, 0
    %v376 = vadd.f32 %v372, %v375
    %v377 = vadd.f32 %v373, %v375
    %v378 = vadd.f32 %v374, %v375
    %v379 = vunpack.c.l.bf16 %v83
    %v380 = vunpack.c.l.bf16 %v84
    %v381 = vunpack.c.l.bf16 %v85
    %v382 = vadd.f32 %v379, %v376
    %v383 = vadd.f32 %v380, %v377
    %v384 = vadd.f32 %v381, %v378
    %v385 = vld [vmem:[%s10] sm:$0x1]
    %vm386 = vcmp.gt.f32.partialorder %v382, 0.0
    %vm387 = vcmp.gt.f32.partialorder %v383, 0.0
    %vm388 = vcmp.gt.f32.partialorder %v384, 0.0
    %s390 = vtos %v385
    %v391 = vstv %s390
    %v393 = vmul.f32 %v391, %v382
    %v394 = vmul.f32 %v391, %v383
    %v395 = vmul.f32 %v391, %v384
    %v396 = vsel %vm386, %v382, %v393
    %v397 = vsel %vm387, %v383, %v394
    %v398 = vsel %vm388, %v384, %v395
    %v402 = vrot.slane %v396, 1
    %v403 = vrot.slane %v396, 2
    %v404 = vrot.slane %v396, 3
    %v405 = vrot.slane %v396, 4
    %v406 = vrot.slane %v396, 5
    %v407 = vrot.slane %v396, 6
    %v408 = vrot.slane %v396, 7
    %v409 = vrot.slane %v397, 1
    %v410 = vrot.slane %v397, 2
    %v411 = vrot.slane %v397, 3
    %v412 = vrot.slane %v397, 4
    %v413 = vrot.slane %v397, 5
    %v414 = vrot.slane %v397, 6
    %v415 = vrot.slane %v397, 7
    %v416 = vrot.slane %v398, 1
    %417 = vst [vmem:[#allocation1] ss:$9 sm:$0xff] %v396
    %s418 = scalar_lea.vmem [#allocation1], 1
    %419 = vst [vmem:[%s418] ss:$9 sm:$0xff] %v402
    %s420 = scalar_lea.vmem [#allocation1], 2
    %421 = vst [vmem:[%s420] ss:$9 sm:$0xff] %v403
    %v422 = vld [vmem:[#allocation1] sm:$0xff]
    %423 = vst [vmem:[#allocation1] ss:$9 sm:$0xff] %v404
    %424 = vst [vmem:[%s418] ss:$9 sm:$0xff] %v405
    %425 = vst [vmem:[%s420] ss:$9 sm:$0xff] %v406
    %v426 = vld [vmem:[#allocation1] sm:$0xff]
    %427 = vst [vmem:[#allocation1] ss:$9 sm:$0xff] %v407
    %428 = vst [vmem:[%s418] ss:$9 sm:$0xff] %v408
    %429 = vst [vmem:[%s420] ss:$9 sm:$0xff] %v397
    %v430 = vld [vmem:[#allocation1] sm:$0xff]
    %431 = vst [vmem:[#allocation1] ss:$9 sm:$0xff] %v409
    %432 = vst [vmem:[%s418] ss:$9 sm:$0xff] %v410
    %433 = vst [vmem:[%s420] ss:$9 sm:$0xff] %v411
    %v434 = vld [vmem:[#allocation1] sm:$0xff]
    %435 = vst [vmem:[#allocation1] ss:$9 sm:$0xff] %v412
    %436 = vst [vmem:[%s418] ss:$9 sm:$0xff] %v413
    %437 = vst [vmem:[%s420] ss:$9 sm:$0xff] %v414
    %v438 = vld [vmem:[#allocation1] sm:$0xff]
    %439 = vst [vmem:[#allocation1] ss:$9 sm:$0xff] %v415
    %440 = vst [vmem:[%s418] ss:$9 sm:$0xff] %v398
    %441 = vst [vmem:[%s420] ss:$9 sm:$0xff] %v416
    %v442 = vld [vmem:[#allocation1] sm:$0xff]
    %vm449 = vcmask 1042432
    %v450 = vsel %vm449, %v422, -inf
    %v451 = vrot.slane %v450, 4
    %v452 = vmax.f32 %v450, %v451
    %v453 = vrot.slane %v452, 2
    %v454 = vmax.f32 %v452, %v453
    %v455 = vrot.slane %v454, 1
    %v456 = vmax.f32 %v454, %v455
    %v457 = vsel %vm449, %v426, -inf
    %v458 = vrot.slane %v457, 4
    %v459 = vmax.f32 %v457, %v458
    %v460 = vrot.slane %v459, 2
    %v461 = vmax.f32 %v459, %v460
    %v462 = vrot.slane %v461, 1
    %v463 = vmax.f32 %v461, %v462
    %v464 = vsel %vm449, %v430, -inf
    %v465 = vrot.slane %v464, 4
    %v466 = vmax.f32 %v464, %v465
    %v467 = vrot.slane %v466, 2
    %v468 = vmax.f32 %v466, %v467
    %v469 = vrot.slane %v468, 1
    %v470 = vmax.f32 %v468, %v469
    %v471 = vsel %vm449, %v434, -inf
    %v472 = vrot.slane %v471, 4
    %v473 = vmax.f32 %v471, %v472
    %v474 = vrot.slane %v473, 2
    %v475 = vmax.f32 %v473, %v474
    %v476 = vrot.slane %v475, 1
    %v477 = vmax.f32 %v475, %v476
    %v478 = vsel %vm449, %v438, -inf
    %v479 = vrot.slane %v478, 4
    %v480 = vmax.f32 %v478, %v479
    %v481 = vrot.slane %v480, 2
    %v482 = vmax.f32 %v480, %v481
    %v483 = vrot.slane %v482, 1
    %v484 = vmax.f32 %v482, %v483
    %v485 = vsel %vm449, %v442, -inf
    %v486 = vrot.slane %v485, 4
    %v487 = vmax.f32 %v485, %v486
    %v488 = vrot.slane %v487, 2
    %v489 = vmax.f32 %v487, %v488
    %v490 = vrot.slane %v489, 1
    %v491 = vmax.f32 %v489, %v490
    %v492 = vpack.c.bf16 %v456, %v456
    %v493 = vpack.c.bf16 %v463, %v463
    %v494 = vpack.c.bf16 %v470, %v470
    %v495 = vpack.c.bf16 %v477, %v477
    %v496 = vpack.c.bf16 %v484, %v484
    %v497 = vpack.c.bf16 %v491, %v491
    %s498 = scalar_lea.vmem %s1, 64
    %v499 = vld [vmem:[%s498] sm:$0xf]
    %v500 = vld [vmem:[%s498 + $0x4] sm:$0xf]
    %v501 = vld [vmem:[%s498 + $0x8] sm:$0xf]
    %v502 = vld [vmem:[%s498 + $0xc] sm:$0xf]
    %v503 = vld [vmem:[%s498 + $0x10] sm:$0xf]
    %v504 = vld [vmem:[%s498 + $0x14] sm:$0xf]
    %v505 = vld [vmem:[%s498 + $0x18] sm:$0xf]
    %v506 = vld [vmem:[%s498 + $0x1c] sm:$0xf]
    %v507 = vld [vmem:[%s498 + $0x20] sm:$0xf]
    %v508 = vld [vmem:[%s498 + $0x24] sm:$0xf]
    %v509 = vld [vmem:[%s498 + $0x28] sm:$0xf]
    %v510 = vld [vmem:[%s498 + $0x2c] sm:$0xf]
    %v511 = vld [vmem:[%s498 + $0x30] sm:$0xf]
    %v512 = vld [vmem:[%s498 + $0x34] sm:$0xf]
    %v513 = vld [vmem:[%s498 + $0x38] sm:$0xf]
    %v514 = vld [vmem:[%s498 + $0x3c] sm:$0xf]
    %v515 = vld [vmem:[%s2 + $0x1] sm:$0x1]
    %v516 = vperm.slane %v515, 0
    %v523 = vperm.slane %v492, 0
    %v524 = vperm.slane %v493, 0
    %v525 = vperm.slane %v494, 0
    %v526 = vperm.slane %v495, 0
    %v527 = vperm.slane %v496, 0
    %v528 = vperm.slane %v497, 0
    %v529 = vunpack.c.l.b16 %v523
    %v530 = vunpack.c.l.b16 %v524
    %v531 = vunpack.c.l.b16 %v525
    %v532 = vunpack.c.l.b16 %v526
    %v533 = vunpack.c.l.b16 %v527
    %v534 = vunpack.c.l.b16 %v528
    %vm535 = vcmask 1041409
    %v536 = vsel %vm535, %v530, %v529
    %vm537 = vcmask 1042434
    %v538 = vsel %vm537, %v531, %v536
    %vm539 = vcmask 1043459
    %v540 = vsel %vm539, %v532, %v538
    %vm541 = vcmask 1044484
    %v542 = vsel %vm541, %v533, %v540
    %vm543 = vcmask 1045509
    %v544 = vsel %vm543, %v534, %v542
    %v545 = vpack.c.b16 %v544, %v544
    %v563 = vunpack.c.l.b16 %v499
    %v564 = vunpack.c.l.b16 %v500
    %v565 = vunpack.c.l.b16 %v501
    %v566 = vunpack.c.l.b16 %v502
    %v567 = vunpack.c.l.b16 %v503
    %v568 = vunpack.c.l.b16 %v504
    %v569 = vunpack.c.l.b16 %v505
    %v570 = vunpack.c.l.b16 %v506
    %v571 = vunpack.c.l.b16 %v507
    %v572 = vunpack.c.l.b16 %v508
    %v573 = vunpack.c.l.b16 %v509
    %v574 = vunpack.c.l.b16 %v510
    %v575 = vunpack.c.l.b16 %v511
    %v576 = vunpack.c.l.b16 %v512
    %v577 = vunpack.c.l.b16 %v513
    %v578 = vunpack.c.l.b16 %v514
    %v579 = vpack.c.b16 %v564, %v563
    %v580 = vpack.c.b16 %v566, %v565
    %v581 = vpack.c.b16 %v568, %v567
    %v582 = vpack.c.b16 %v570, %v569
    %v583 = vpack.c.b16 %v572, %v571
    %v584 = vpack.c.b16 %v574, %v573
    %v585 = vpack.c.b16 %v576, %v575
    %v586 = vpack.c.b16 %v578, %v577
    %595 = vmatpush.bf16.msra.mxu0 %v586
    %596 = vmatpush.bf16.msra.mxu0 %v585
    %597 = vmatpush.bf16.msra.mxu0 %v584
    %598 = vmatpush.bf16.msra.mxu0 %v583
    %599 = vmatpush.bf16.msra.mxu0 %v582
    %600 = vmatpush.bf16.msra.mxu0 %v581
    %601 = vmatpush.bf16.msra.mxu0 %v580
    %602 = vmatpush.bf16.msra.mxu0 %v579
    %603 = vmatmul.bf16.gmra.mxu0 %v545
    %v604 = vpop.f32.mrf.mxu0
    %v605 = vadd.f32 %v516, %v604
    %v606 = vpop.f32.mrf.mxu0
    %607 = vdwg.mxu0
    %v608 = vld [vmem:[%s3 + $0x1] sm:$0x1]
    %v609 = vld [vmem:[%s4 + $0x1] sm:$0x1]
    %vm610 = vcmask 1045504
    %v611 = vsel %vm610, %v605, 0.0
    %v612 = vrot.slane %v611, 4
    %v613 = vadd.f32 %v611, %v612
    %v614 = vrot.slane %v613, 2
    %v615 = vadd.f32 %v613, %v614
    %v616 = vrot.slane %v615, 1
    %v617 = vadd.f32 %v615, %v616
    %v618 = vmul.f32 %v605, %v605
    %v619 = vsel %vm610, %v618, 0.0
    %v620 = vrot.slane %v619, 4
    %v621 = vadd.f32 %v619, %v620
    %v622 = vrot.slane %v621, 2
    %v623 = vadd.f32 %v621, %v622
    %v624 = vrot.slane %v623, 1
    %v625 = vadd.f32 %v623, %v624
    %v626 = vmul.f32 %v617, 0.16666667
    %v627 = vmul.f32 %v625, 0.16666667
    %v628 = vmul.f32 %v626, %v626
    %v629 = vsub.f32 %v627, %v628
    %v630 = vadd.f32 %v629, 1e-05
    %v631 = vrsqrt.pop %v630
    %v632 = vmul.f32 %v631, %v630
    %v633 = vmul.f32 %v632, %v631
    %v634 = vmul.f32 0.5, %v633
    %v635 = vsub.f32 1.5, %v634
    %v636 = vmul.f32 %v631, %v635
    %vm637 = vweird.f32 %v630
    %vm638 = vweird.f32 %v631
    %vm639 = vmor %vm637, %vm638
    %v640 = vsel %vm639, %v631, %v636
    %v641 = vmul.f32 %v608, %v640
    %v642 = vmul.f32 %v626, %v641
    %v643 = vsub.f32 %v609, %v642
    %v644 = vperm.slane %v641, 0
    %v645 = vmul.f32 %v605, %v644
    %v646 = vperm.slane %v643, 0
    %v647 = vadd.f32 %v645, %v646
    %v648 = vld [vmem:[%s5 + $0x1] sm:$0x1]
    %vm649 = vcmp.gt.f32.partialorder %v647, 0.0
    %s651 = vtos %v648
    %v652 = vstv %s651
    %v654 = vmul.f32 %v652, %v647
    %v655 = vsel %vm649, %v647, %v654
    %v656 = vpack.c.bf16 %v655, %v655
    %s657 = scalar_lea.vmem [#allocation2], 64
    %v658 = vld [vmem:[%s657] sm:$0xf]
    %v659 = vld [vmem:[%s657 + $0x4] sm:$0xf]
    %v660 = vld [vmem:[%s657 + $0x8] sm:$0xf]
    %v661 = vld [vmem:[%s657 + $0xc] sm:$0xf]
    %v662 = vld [vmem:[%s657 + $0x10] sm:$0xf]
    %v663 = vld [vmem:[%s657 + $0x14] sm:$0xf]
    %v664 = vld [vmem:[%s657 + $0x18] sm:$0xf]
    %v665 = vld [vmem:[%s657 + $0x1c] sm:$0xf]
    %v666 = vld [vmem:[%s657 + $0x20] sm:$0xf]
    %v667 = vld [vmem:[%s657 + $0x24] sm:$0xf]
    %v668 = vld [vmem:[%s657 + $0x28] sm:$0xf]
    %v669 = vld [vmem:[%s657 + $0x2c] sm:$0xf]
    %v670 = vld [vmem:[%s657 + $0x30] sm:$0xf]
    %v671 = vld [vmem:[%s657 + $0x34] sm:$0xf]
    %v672 = vld [vmem:[%s657 + $0x38] sm:$0xf]
    %v673 = vld [vmem:[%s657 + $0x3c] sm:$0xf]
    %v674 = vld [vmem:[%s7 + $0x1] sm:$0x1]
    %v675 = vperm.slane %v674, 0
    %v692 = vunpack.c.l.b16 %v658
    %v693 = vunpack.c.l.b16 %v659
    %v694 = vunpack.c.l.b16 %v660
    %v695 = vunpack.c.l.b16 %v661
    %v696 = vunpack.c.l.b16 %v662
    %v697 = vunpack.c.l.b16 %v663
    %v698 = vunpack.c.l.b16 %v664
    %v699 = vunpack.c.l.b16 %v665
    %v700 = vunpack.c.l.b16 %v666
    %v701 = vunpack.c.l.b16 %v667
    %v702 = vunpack.c.l.b16 %v668
    %v703 = vunpack.c.l.b16 %v669
    %v704 = vunpack.c.l.b16 %v670
    %v705 = vunpack.c.l.b16 %v671
    %v706 = vunpack.c.l.b16 %v672
    %v707 = vunpack.c.l.b16 %v673
    %v708 = vpack.c.b16 %v693, %v692
    %v709 = vpack.c.b16 %v695, %v694
    %v710 = vpack.c.b16 %v697, %v696
    %v711 = vpack.c.b16 %v699, %v698
    %v712 = vpack.c.b16 %v701, %v700
    %v713 = vpack.c.b16 %v703, %v702
    %v714 = vpack.c.b16 %v705, %v704
    %v715 = vpack.c.b16 %v707, %v706
    %724 = vmatpush.bf16.msra.mxu0 %v715
    %725 = vmatpush.bf16.msra.mxu0 %v714
    %726 = vmatpush.bf16.msra.mxu0 %v713
    %727 = vmatpush.bf16.msra.mxu0 %v712
    %728 = vmatpush.bf16.msra.mxu0 %v711
    %729 = vmatpush.bf16.msra.mxu0 %v710
    %730 = vmatpush.bf16.msra.mxu0 %v709
    %731 = vmatpush.bf16.msra.mxu0 %v708
    %732 = vmatmul.bf16.gmra.mxu0 %v656
    %v733 = vpop.f32.mrf.mxu0
    %v734 = vadd.f32 %v675, %v733
    %v735 = vpop.f32.mrf.mxu0
    %736 = vdwg.mxu0
    %v737 = vld [vmem:[%s8 + $0x1] sm:$0x1]
    %v738 = vld [vmem:[%s9 + $0x1] sm:$0x1]
    %v739 = vsel %vm610, %v734, 0.0
    %v740 = vrot.slane %v739, 4
    %v741 = vadd.f32 %v739, %v740
    %v742 = vrot.slane %v741, 2
    %v743 = vadd.f32 %v741, %v742
    %v744 = vrot.slane %v743, 1
    %v745 = vadd.f32 %v743, %v744
    %v746 = vmul.f32 %v734, %v734
    %v747 = vsel %vm610, %v746, 0.0
    %v748 = vrot.slane %v747, 4
    %v749 = vadd.f32 %v747, %v748
    %v750 = vrot.slane %v749, 2
    %v751 = vadd.f32 %v749, %v750
    %v752 = vrot.slane %v751, 1
    %v753 = vadd.f32 %v751, %v752
    %v754 = vmul.f32 %v745, 0.16666667
    %v755 = vmul.f32 %v753, 0.16666667
    %v756 = vmul.f32 %v754, %v754
    %v757 = vsub.f32 %v755, %v756
    %v758 = vadd.f32 %v757, 1e-05
    %v759 = vrsqrt.pop %v758
    %v760 = vmul.f32 %v759, %v758
    %v761 = vmul.f32 %v760, %v759
    %v762 = vmul.f32 0.5, %v761
    %v763 = vsub.f32 1.5, %v762
    %v764 = vmul.f32 %v759, %v763
    %vm765 = vweird.f32 %v758
    %vm766 = vweird.f32 %v759
    %vm767 = vmor %vm765, %vm766
    %v768 = vsel %vm767, %v759, %v764
    %v769 = vmul.f32 %v737, %v768
    %v770 = vmul.f32 %v754, %v769
    %v771 = vsub.f32 %v738, %v770
    %v772 = vperm.slane %v769, 0
    %v773 = vmul.f32 %v734, %v772
    %v774 = vperm.slane %v771, 0
    %v775 = vadd.f32 %v773, %v774
    %v776 = vunpack.c.l.bf16 %v492
    %v777 = vunpack.c.l.bf16 %v493
    %v778 = vunpack.c.l.bf16 %v494
    %v779 = vunpack.c.l.bf16 %v495
    %v780 = vunpack.c.l.bf16 %v496
    %v781 = vunpack.c.l.bf16 %v497
    %v783 = vrot.slane %v775, 1
    %v784 = vrot.slane %v775, 2
    %v785 = vrot.slane %v775, 3
    %v786 = vrot.slane %v775, 4
    %v787 = vrot.slane %v775, 5
    %v794 = vadd.f32 %v776, %v775
    %v795 = vadd.f32 %v777, %v783
    %v796 = vadd.f32 %v778, %v784
    %v797 = vadd.f32 %v779, %v785
    %v798 = vadd.f32 %v780, %v786
    %v799 = vadd.f32 %v781, %v787
    %v800 = vld [vmem:[%s10 + $0x1] sm:$0x1]
    %vm801 = vcmp.gt.f32.partialorder %v794, 0.0
    %vm802 = vcmp.gt.f32.partialorder %v795, 0.0
    %vm803 = vcmp.gt.f32.partialorder %v796, 0.0
    %vm804 = vcmp.gt.f32.partialorder %v797, 0.0
    %vm805 = vcmp.gt.f32.partialorder %v798, 0.0
    %vm806 = vcmp.gt.f32.partialorder %v799, 0.0
    %s808 = vtos %v800
    %v809 = vstv %s808
    %v811 = vmul.f32 %v809, %v794
    %v812 = vmul.f32 %v809, %v795
    %v813 = vmul.f32 %v809, %v796
    %v814 = vmul.f32 %v809, %v797
    %v815 = vmul.f32 %v809, %v798
    %v816 = vmul.f32 %v809, %v799
    %v817 = vsel %vm801, %v794, %v811
    %v818 = vsel %vm802, %v795, %v812
    %v819 = vsel %vm803, %v796, %v813
    %v820 = vsel %vm804, %v797, %v814
    %v821 = vsel %vm805, %v798, %v815
    %v822 = vsel %vm806, %v799, %v816
    %vm823 = vcmask 1040384
    %v824 = vsel %vm823, %v817, -inf
    %v825 = vsel %vm823, %v818, -inf
    %v826 = vsel %vm823, %v819, -inf
    %v827 = vmax.f32 %v824, %v826
    %v828 = vmax.f32 %v827, %v825
    %v829 = vsel %vm823, %v820, -inf
    %v830 = vsel %vm823, %v821, -inf
    %v831 = vsel %vm823, %v822, -inf
    %v832 = vmax.f32 %v829, %v831
    %v833 = vmax.f32 %v832, %v830
    %v834 = vpack.c.bf16 %v828, %v828
    %v835 = vpack.c.bf16 %v833, %v833
    %v836 = vld [vmem:[%s11] sm:$0xf]
    %v837 = vld [vmem:[%s11 + $0x4] sm:$0xf]
    %v838 = vld [vmem:[%s11 + $0x8] sm:$0xf]
    %v839 = vld [vmem:[%s11 + $0xc] sm:$0xf]
    %v840 = vld [vmem:[%s11 + $0x10] sm:$0xf]
    %v841 = vld [vmem:[%s11 + $0x14] sm:$0xf]
    %v842 = vld [vmem:[%s11 + $0x18] sm:$0xf]
    %v843 = vld [vmem:[%s11 + $0x1c] sm:$0xf]
    %v844 = vld [vmem:[%s11 + $0x20] sm:$0xf]
    %v845 = vld [vmem:[%s11 + $0x24] sm:$0xf]
    %v846 = vld [vmem:[%s11 + $0x28] sm:$0xf]
    %v847 = vld [vmem:[%s11 + $0x2c] sm:$0xf]
    %v848 = vld [vmem:[%s11 + $0x30] sm:$0xf]
    %v849 = vld [vmem:[%s11 + $0x34] sm:$0xf]
    %v850 = vld [vmem:[%s11 + $0x38] sm:$0xf]
    %v851 = vld [vmem:[%s11 + $0x3c] sm:$0xf]
    %v852 = vld [vmem:[%s12] sm:$0x1]
    %v854 = vperm.slane %v852, 0
    %v858 = vunpack.c.l.b16 %v834
    %v859 = vunpack.c.l.b16 %v835
    %v860 = vrot.slane %v859, 7
    %v861 = vsel %vm535, %v860, %v858
    %v862 = vpack.c.b16 %v861, %v861
    %v880 = vunpack.c.l.b16 %v836
    %v881 = vunpack.c.l.b16 %v837
    %v882 = vunpack.c.l.b16 %v838
    %v883 = vunpack.c.l.b16 %v839
    %v884 = vunpack.c.l.b16 %v840
    %v885 = vunpack.c.l.b16 %v841
    %v886 = vunpack.c.l.b16 %v842
    %v887 = vunpack.c.l.b16 %v843
    %v888 = vunpack.c.l.b16 %v844
    %v889 = vunpack.c.l.b16 %v845
    %v890 = vunpack.c.l.b16 %v846
    %v891 = vunpack.c.l.b16 %v847
    %v892 = vunpack.c.l.b16 %v848
    %v893 = vunpack.c.l.b16 %v849
    %v894 = vunpack.c.l.b16 %v850
    %v895 = vunpack.c.l.b16 %v851
    %v896 = vpack.c.b16 %v881, %v880
    %v897 = vpack.c.b16 %v883, %v882
    %v898 = vpack.c.b16 %v885, %v884
    %v899 = vpack.c.b16 %v887, %v886
    %v900 = vpack.c.b16 %v889, %v888
    %v901 = vpack.c.b16 %v891, %v890
    %v902 = vpack.c.b16 %v893, %v892
    %v903 = vpack.c.b16 %v895, %v894
    %912 = vmatpush.bf16.msra.mxu0 %v903
    %913 = vmatpush.bf16.msra.mxu0 %v902
    %914 = vmatpush.bf16.msra.mxu0 %v901
    %915 = vmatpush.bf16.msra.mxu0 %v900
    %916 = vmatpush.bf16.msra.mxu0 %v899
    %917 = vmatpush.bf16.msra.mxu0 %v898
    %918 = vmatpush.bf16.msra.mxu0 %v897
    %919 = vmatpush.bf16.msra.mxu0 %v896
    %920 = vmatmul.bf16.gmra.mxu0 %v862
    %v921 = vpop.f32.mrf.mxu0
    %v922 = vadd.f32 %v854, %v921
    %v923 = vpop.f32.mrf.mxu0
    %924 = vdwg.mxu0
    %v925 = vadd.f32 %v922, 0.0
    %v926 = vpack.c.bf16 %v925, %v925
    %v927 = vld [vmem:[#allocation5] sm:$0xf]
    %v928 = vld [vmem:[#allocation5 + $0x4] sm:$0xf]
    %v929 = vld [vmem:[#allocation5 + $0x8] sm:$0xf]
    %v930 = vld [vmem:[#allocation5 + $0xc] sm:$0xf]
    %v931 = vld [vmem:[#allocation5 + $0x10] sm:$0xf]
    %v932 = vld [vmem:[#allocation5 + $0x14] sm:$0xf]
    %v933 = vld [vmem:[#allocation5 + $0x18] sm:$0xf]
    %v934 = vld [vmem:[#allocation5 + $0x1c] sm:$0xf]
    %v935 = vld [vmem:[#allocation5 + $0x20] sm:$0xf]
    %v936 = vld [vmem:[#allocation5 + $0x24] sm:$0xf]
    %v937 = vld [vmem:[#allocation5 + $0x28] sm:$0xf]
    %v938 = vld [vmem:[#allocation5 + $0x2c] sm:$0xf]
    %v939 = vld [vmem:[#allocation5 + $0x30] sm:$0xf]
    %v940 = vld [vmem:[#allocation5 + $0x34] sm:$0xf]
    %v941 = vld [vmem:[#allocation5 + $0x38] sm:$0xf]
    %v942 = vld [vmem:[#allocation5 + $0x3c] sm:$0xf]
    %v943 = vld [vmem:[%s14] sm:$0x1]
    %v945 = vperm.slane %v943, 0
    %v963 = vunpack.c.l.b16 %v927
    %v964 = vunpack.c.l.b16 %v928
    %v965 = vunpack.c.l.b16 %v929
    %v966 = vunpack.c.l.b16 %v930
    %v967 = vunpack.c.l.b16 %v931
    %v968 = vunpack.c.l.b16 %v932
    %v969 = vunpack.c.l.b16 %v933
    %v970 = vunpack.c.l.b16 %v934
    %v971 = vunpack.c.l.b16 %v935
    %v972 = vunpack.c.l.b16 %v936
    %v973 = vunpack.c.l.b16 %v937
    %v974 = vunpack.c.l.b16 %v938
    %v975 = vunpack.c.l.b16 %v939
    %v976 = vunpack.c.l.b16 %v940
    %v977 = vunpack.c.l.b16 %v941
    %v978 = vunpack.c.l.b16 %v942
    %v979 = vpack.c.b16 %v964, %v963
    %v980 = vpack.c.b16 %v966, %v965
    %v981 = vpack.c.b16 %v968, %v967
    %v982 = vpack.c.b16 %v970, %v969
    %v983 = vpack.c.b16 %v972, %v971
    %v984 = vpack.c.b16 %v974, %v973
    %v985 = vpack.c.b16 %v976, %v975
    %v986 = vpack.c.b16 %v978, %v977
    %995 = vmatpush.bf16.msra.mxu0 %v986
    %996 = vmatpush.bf16.msra.mxu0 %v985
    %997 = vmatpush.bf16.msra.mxu0 %v984
    %998 = vmatpush.bf16.msra.mxu0 %v983
    %999 = vmatpush.bf16.msra.mxu0 %v982
    %1000 = vmatpush.bf16.msra.mxu0 %v981
    %1001 = vmatpush.bf16.msra.mxu0 %v980
    %1002 = vmatpush.bf16.msra.mxu0 %v979
    %1003 = vmatmul.bf16.gmra.mxu0 %v926
    %v1004 = vpop.f32.mrf.mxu0
    %v1005 = vadd.f32 %v945, %v1004
    %v1006 = vpop.f32.mrf.mxu0
    %1007 = vdwg.mxu0
    %vm1008 = vcmask 33792
    %1009 = vst.msk [vmem:[#allocation7] sm:$0x3] %vm1008, %v1005
    // Predicated region
    $region70: #{_lambda_.3} parent=1 // pred_check
      _
    $region71: #{_lambda_.3} parent=1 // pred_check_branch
      %1011 = sbr.rel (0) target = $region73
    $region72: #{_lambda_.3} parent=1 // pred_region
      %1013 = vsyncadd [#allocation4], 0
      %s1015 = sshll.u32 [#allocation7], 4
      %s1016 = int_to_ptr.vmem [resolvable:$true] %s1015
      %s1017 = sshll.u32 %s15, 4
      %s1018 = int_to_ptr.hbm [resolvable:$true] %s1017
      %1020 = dma.vmem_to_hbm [thread:$0]  %s1016, 32, %s1018, [#allocation4]
    $region73: #{_lambda_.3} parent=1 // pred_fallthru
      _
    // Predicated region
    $region74: #{_lambda_.3} parent=1 // pred_check
      _
    $region75: #{_lambda_.3} parent=1 // pred_check_branch
      %1022 = sbr.rel (0) target = $region77
    $region76: #{_lambda_.3} parent=1 // pred_region
      %1024 = dma.done [#allocation4], 32
    $region77: #{_lambda_.3} parent=1 // pred_fallthru
      _
    %1025 = vsyncpa [#allocation3], 1
    %1026 = vsyncpa [#allocation6], 1
    %1027 = vsyncpa [#allocation4], 1

</llo_original>
